<compile_context>
chip_gen: v7x
topology: tpu7x:2x2x1
jax: 0.10.0
libtpu: 0.0.40
codegen_flags: <defaults>
</compile_context>

<pallas_src>
import functools

import jax
import jax.numpy as jnp
from jax.experimental import pallas as pl
from jax.experimental.pallas import tpu as pltpu

BN_EPS = 1e-5
NUM_CLASSES = 10
CONV1_PAD = 128      # conv1 output channels padded lane-dense (10 -> 128)
CONV2_PAD = 32       # conv2 output channels padded (20 -> 32); feat = 16*32 = 512
FC_PAD = 128         # fc1 / fc2 output padding (50 -> 128, 10 -> 128)
ROW_TILE_CAP = 1024  # rows per grid step (>=512 already at the HBM roofline)


# --------------------------------------------------------------------------
# Pallas kernels
# --------------------------------------------------------------------------
def _conv_stage_kernel(p00_ref, p01_ref, p10_ref, p11_ref, w_ref, b_ref,
                       y_ref, stats_ref, *, n_valid):
    """Fused conv GEMM for the 4 pool-window corners -> max_pool2d(2) -> relu
    -> per-tile BatchNorm partial statistics.

    p**   : [TR, K]  bf16 im2col patches, one per 2x2 pool corner
            (previous BN affine already folded into w/b by the wrapper)
    w     : [K, C]   bf16 conv weight, output channels zero-padded
    b     : [1, C]   f32 conv bias (padded)
    y     : [TR, C]  bf16 pooled + relu'd activations (pre-BN of this layer)
    stats : [8, C]   f32; row 0 = per-channel sum, row 1 = per-channel sumsq
    n_valid : static int or None; rows >= n_valid are padding -> masked stats
    """
    w = w_ref[...]

    def corner(p_ref):
        return jnp.dot(p_ref[...], w, preferred_element_type=jnp.float32)

    y = jnp.maximum(jnp.maximum(corner(p00_ref), corner(p01_ref)),
                    jnp.maximum(corner(p10_ref), corner(p11_ref)))  # max_pool2d(2)
    y = jnp.maximum(y + b_ref[...], 0.0)                            # bias + relu (f32)
    y_ref[...] = y.astype(y_ref.dtype)                              # bf16 store

    if n_valid is not None:                                          # mask pad rows
        rows = y.shape[0]
        gidx = (pl.program_id(0) * rows
                + jax.lax.broadcasted_iota(jnp.int32, (rows, 1), 0))
        y = jnp.where(gidx < n_valid, y, 0.0)

    stats_ref[0:1, :] = jnp.sum(y, axis=0, keepdims=True)
    stats_ref[1:2, :] = jnp.sum(y * y, axis=0, keepdims=True)
    stats_ref[2:8, :] = jnp.zeros((6, y.shape[1]), jnp.float32)


def _head_kernel(x_ref, w1_ref, b1_ref, w2_ref, b2_ref, o_ref):
    """Fused fc1 (+ folded bn2 affine) -> relu -> fc2 -> masked log_softmax."""
    h = jnp.dot(x_ref[...], w1_ref[...],
                preferred_element_type=jnp.float32) + b1_ref[...]
    h = jnp.maximum(h, 0.0)
    logits = jnp.dot(h.astype(jnp.bfloat16), w2_ref[...],
                     preferred_element_type=jnp.float32) + b2_ref[...]
    lane = jax.lax.broadcasted_iota(jnp.int32, logits.shape, 1)
    logits = jnp.where(lane < NUM_CLASSES, logits, -1e30)           # mask padded classes
    m = jnp.max(logits, axis=1, keepdims=True)
    z = logits - m
    lse = jnp.log(jnp.sum(jnp.exp(z), axis=1, keepdims=True))
    o_ref[...] = z - lse


# --------------------------------------------------------------------------
# Row tiling (hardened), im2col corner patches, BN finalization (tiny XLA glue)
# --------------------------------------------------------------------------
def _round_up(x, m):
    return (x + m - 1) // m * m


def _choose_rows(n, cap=ROW_TILE_CAP):
    """Return (tile, n_pad): tile is a multiple of 8 (or == n for tiny n),
    n_pad is a multiple of tile.  Guarantees >=2 grid steps when there is
    enough work (v7x dual-TensorCore) and never a single oversized tile."""
    if n <= 8:
        return n, n
    n8 = _round_up(n, 8)
    min_steps = 2 if n8 >= 16 else 1
    steps = max(min_steps, -(-n8 // cap))            # ceil div
    tile = _round_up(-(-n8 // steps), 8)
    return tile, tile * steps


def _corner_patches(x, k):
    """x: [B, H, W, C] -> 4 im2col patch matrices [B*Hp*Wp, k*k*C], one per
    position of the 2x2 max-pool window that follows the valid conv."""
    B, H, W, C = x.shape
    Hp, Wp = (H - k + 1) // 2, (W - k + 1) // 2
    corners = []
    for a in range(2):
        for b in range(2):
            taps = [x[:, a + i: a + i + 2 * Hp: 2, b + j: b + j + 2 * Wp: 2, :]
                    for i in range(k) for j in range(k)]
            p = jnp.stack(taps, axis=3)                  # [B, Hp, Wp, k*k, C]
            corners.append(p.reshape(B * Hp * Wp, k * k * C))
    return corners, (Hp, Wp)


def _conv_stage(patches, w, b, n_valid):
    """Run the fused conv+pool+relu+BN-stats kernel over row tiles."""
    K = patches[0].shape[1]
    C = w.shape[1]
    tile, n_pad = _choose_rows(n_valid)
    nt = n_pad // tile
    if n_pad != n_valid:
        patches = [jnp.pad(p, ((0, n_pad - n_valid), (0, 0))) for p in patches]
    kern = functools.partial(_conv_stage_kernel,
                             n_valid=(n_valid if n_pad != n_valid else None))

    def const(shape):
        return pl.BlockSpec(shape, lambda i: (0, 0))

    y, stats = pl.pallas_call(
        kern,
        out_shape=(jax.ShapeDtypeStruct((n_pad, C), jnp.bfloat16),
                   jax.ShapeDtypeStruct((nt * 8, C), jnp.float32)),
        grid=(nt,),
        in_specs=([pl.BlockSpec((tile, K), lambda i: (i, 0)) for _ in range(4)]
                  + [const(w.shape), const((1, C))]),
        out_specs=(pl.BlockSpec((tile, C), lambda i: (i, 0)),
                   pl.BlockSpec((8, C), lambda i: (i, 0))),
        compiler_params=pltpu.CompilerParams(
            dimension_semantics=("parallel",)),
    )(*patches, w, b)
    return y, stats.reshape(nt, 8, C)


def _bn_scale_shift(stats, n_rows, gamma, beta):
    """Finalize training-mode BatchNorm (biased batch variance) from per-tile
    partial sums; bn(y) == y * scale + shift (per channel)."""
    total = jnp.sum(stats[:, 0, :], axis=0, keepdims=True)
    total_sq = jnp.sum(stats[:, 1, :], axis=0, keepdims=True)
    mean = total / n_rows
    var = jnp.maximum(total_sq / n_rows - mean * mean, 0.0)
    scale = gamma * jax.lax.rsqrt(var + BN_EPS)
    shift = beta - mean * scale
    return scale, shift


def _head(feat, w1, b1, w2, b2):
    n, d = feat.shape
    tile, n_pad = _choose_rows(n)
    nt = n_pad // tile
    if n_pad != n:
        feat = jnp.pad(feat, ((0, n_pad - n), (0, 0)))

    def const(shape):
        return pl.BlockSpec(shape, lambda i: (0, 0))

    return pl.pallas_call(
        _head_kernel,
        out_shape=jax.ShapeDtypeStruct((n_pad, w2.shape[1]), jnp.float32),
        grid=(nt,),
        in_specs=[pl.BlockSpec((tile, d), lambda i: (i, 0)),
                  const(w1.shape), const((1, w1.shape[1])),
                  const(w2.shape), const((1, w2.shape[1]))],
        out_specs=pl.BlockSpec((tile, w2.shape[1]), lambda i: (i, 0)),
        compiler_params=pltpu.CompilerParams(
            dimension_semantics=("parallel",)),
    )(feat, w1, b1, w2, b2)


# --------------------------------------------------------------------------
# Parameters (pre-padded / pre-permuted to kernel layouts)
# --------------------------------------------------------------------------
def init_params(key):
    ks = jax.random.split(key, 4)
    C1, C2, F1, F2 = 10, 20, 50, NUM_CLASSES

    # Conv weights in im2col layout [k*k*Cin, Cout], row index = (i*5+j)*Cin + c.
    w1 = jax.random.normal(ks[0], (25 * 1, C1), jnp.float32) * 0.1
    w2 = jax.random.normal(ks[1], (25 * C1, C2), jnp.float32) * 0.05
    # fc weights in PyTorch layout: fc1 input index = c*16 + (h*4 + w).
    fw1 = jax.random.normal(ks[2], (C2 * 16, F1), jnp.float32) * 0.05
    fw2 = jax.random.normal(ks[3], (F1, F2), jnp.float32) * 0.1

    # conv1: lane-dense 128-wide output (bf16, no BN fold needed).
    w1p = jnp.pad(w1, ((0, 0), (0, CONV1_PAD - C1))).astype(jnp.bfloat16)
    # conv2: compact 32-wide output; kept f32 (bn1 affine is folded per forward).
    w2p = jnp.pad(w2, ((0, 0), (0, CONV2_PAD - C2)))
    # fc1: absorb PyTorch's channel-major .view(-1, 320) flatten by permuting
    # rows to the kernel's compact HWC layout ((h*4+w)*32 + c) at init time.
    fw1_hwc = fw1.reshape(C2, 16, F1).transpose(1, 0, 2)            # [16, 20, 50]
    fw1_hwc = jnp.pad(fw1_hwc, ((0, 0), (0, CONV2_PAD - C2), (0, FC_PAD - F1)))
    fw1p = fw1_hwc.reshape(16 * CONV2_PAD, FC_PAD)                  # [512, 128], f32
    # fc2: no fold, store bf16.
    fw2p = jnp.pad(fw2, ((0, FC_PAD - F1), (0, FC_PAD - F2))).astype(jnp.bfloat16)

    return {
        "w1": w1p, "b1": jnp.zeros((1, CONV1_PAD), jnp.float32),
        "w2": w2p, "b2": jnp.zeros((1, CONV2_PAD), jnp.float32),
        "g1": jnp.ones((1, CONV1_PAD), jnp.float32),
        "be1": jnp.zeros((1, CONV1_PAD), jnp.float32),
        "g2": jnp.ones((1, CONV2_PAD), jnp.float32),
        "be2": jnp.zeros((1, CONV2_PAD), jnp.float32),
        "fw1": fw1p, "fb1": jnp.zeros((1, FC_PAD), jnp.float32),
        "fw2": fw2p, "fb2": jnp.zeros((1, FC_PAD), jnp.float32),
    }


# --------------------------------------------------------------------------
# Forward pass
# --------------------------------------------------------------------------
def mnist_forward(x_nchw, params):
    B = x_nchw.shape[0]
    # NCHW -> NHWC is a pure reshape for C=1; cast to bf16 for the MXU.
    x = x_nchw.astype(jnp.bfloat16).reshape(B, 28, 28, 1)

    # ---- conv1 (1->10, k=5) + maxpool(2) + relu; bn1 batch stats ----
    pat1, (h1, w1sp) = _corner_patches(x, 5)          # 4 x [B*12*12, 25] bf16
    n1 = pat1[0].shape[0]
    y1, stats1 = _conv_stage(pat1, params["w1"], params["b1"], n1)
    scale1, shift1 = _bn_scale_shift(stats1, n1, params["g1"], params["be1"])

    # ---- fold bn1 affine into conv2 weight/bias (tiny XLA ops) ----
    s1 = jnp.tile(scale1[:, :10], (1, 25))            # [1, 250] per (tap, channel)
    t1 = jnp.tile(shift1[:, :10], (1, 25))
    w2f = (params["w2"] * s1.T).astype(jnp.bfloat16)  # [250, 32]
    b2f = params["b2"] + t1 @ params["w2"]            # [1, 32]

    # ---- conv2 (10->20, k=5) + maxpool(2) + relu; bn2 batch stats ----
    z1 = y1[:n1].reshape(B, h1, w1sp, CONV1_PAD)[..., :10]   # bf16 [B,12,12,10]
    pat2, (h2, w2sp) = _corner_patches(z1, 5)         # 4 x [B*4*4, 250] bf16
    n2 = pat2[0].shape[0]
    y2, stats2 = _conv_stage(pat2, w2f, b2f, n2)
    scale2, shift2 = _bn_scale_shift(stats2, n2, params["g2"], params["be2"])

    # ---- fold bn2 affine into fc1 weight/bias ----
    s2 = jnp.tile(scale2, (1, h2 * w2sp))             # [1, 512]
    t2 = jnp.tile(shift2, (1, h2 * w2sp))
    fw1f = (params["fw1"] * s2.T).astype(jnp.bfloat16)
    fb1f = params["fb1"] + t2 @ params["fw1"]         # [1, 128]

    # ---- head: fc1 + relu + fc2 + log_softmax (one kernel) ----
    feat = y2[:n2].reshape(B, h2 * w2sp * CONV2_PAD)  # bf16 [B, 512], lane-dense HWC
    logp = _head(feat, fw1f, fb1f, params["fw2"], params["fb2"])   # [B_pad, 128]
    return logp[:B, :NUM_CLASSES]


if __name__ == "__main__":
    key = jax.random.PRNGKey(0)
    pkey, xkey = jax.random.split(key)
    params = init_params(pkey)
    # MNIST-shaped input (28x28 is required for the 320-dim flatten): NCHW.
    x = jax.random.normal(xkey, (2, 1, 28, 28), jnp.float32)

    out = jax.jit(mnist_forward)(x, params)
    out = jax.block_until_ready(out)

    assert out.shape == (2, NUM_CLASSES)
    assert bool(jnp.all(jnp.isfinite(out)))
    # log_softmax rows must exponentiate to ~1
    assert bool(jnp.allclose(jnp.sum(jnp.exp(out), axis=1), 1.0, atol=1e-3))
    print("KERNEL_OK")
</pallas_src>

<mosaic_0001>
module attributes {stable_mosaic.version = 11 : i64} {
  func.func @_conv_stage_kernel(%arg0: i32, %arg1: memref<144x25xbf16, #tpu.memory_space<vmem>>, %arg2: memref<144x25xbf16, #tpu.memory_space<vmem>>, %arg3: memref<144x25xbf16, #tpu.memory_space<vmem>>, %arg4: memref<144x25xbf16, #tpu.memory_space<vmem>>, %arg5: memref<25x128xbf16, #tpu.memory_space<vmem>>, %arg6: memref<1x128xf32, #tpu.memory_space<vmem>>, %arg7: memref<144x128xbf16, #tpu.memory_space<vmem>>, %arg8: memref<8x128xf32, #tpu.memory_space<vmem>>) attributes {dimension_semantics = [#tpu.dimension_semantics<parallel>], iteration_bounds = array<i64: 2>, scalar_prefetch = 0 : i64, scratch_operands = 0 : i64, tpu.core_type = #tpu.core_type<tc>, window_params = [{transform_indices = @transform_0, window_bounds = array<i64: 144, 25>}, {transform_indices = @transform_1, window_bounds = array<i64: 144, 25>}, {transform_indices = @transform_2, window_bounds = array<i64: 144, 25>}, {transform_indices = @transform_3, window_bounds = array<i64: 144, 25>}, {pipeline_mode = #tpu.pipeline_mode<synchronous>, transform_indices = @transform_4, window_bounds = array<i64: 25, 128>}, {pipeline_mode = #tpu.pipeline_mode<synchronous>, transform_indices = @transform_5, window_bounds = array<i64: 1, 128>}, {transform_indices = @transform_6, window_bounds = array<i64: 144, 128>}, {transform_indices = @transform_7, window_bounds = array<i64: 8, 128>}]} {
    %c0 = arith.constant 0 : index
    %c0_0 = arith.constant 0 : index
    %0 = vector.load %arg5[%c0, %c0_0] : memref<25x128xbf16, #tpu.memory_space<vmem>>, vector<25x128xbf16>
    %c0_1 = arith.constant 0 : index
    %c0_2 = arith.constant 0 : index
    %1 = vector.load %arg1[%c0_1, %c0_2] : memref<144x25xbf16, #tpu.memory_space<vmem>>, vector<144x25xbf16>
    %cst = arith.constant dense<0.000000e+00> : vector<144x128xf32>
    %2 = tpu.matmul %1, %0, %cst {dimension_numbers = #tpu.dot_dimension_numbers<[1], [0], [0], [1], [0, 0, 1, 1], [], []>} : vector<144x25xbf16>, vector<25x128xbf16>, vector<144x128xf32> -> vector<144x128xf32>
    %c0_3 = arith.constant 0 : index
    %c0_4 = arith.constant 0 : index
    %3 = vector.load %arg2[%c0_3, %c0_4] : memref<144x25xbf16, #tpu.memory_space<vmem>>, vector<144x25xbf16>
    %cst_5 = arith.constant dense<0.000000e+00> : vector<144x128xf32>
    %4 = tpu.matmul %3, %0, %cst_5 {dimension_numbers = #tpu.dot_dimension_numbers<[1], [0], [0], [1], [0, 0, 1, 1], [], []>} : vector<144x25xbf16>, vector<25x128xbf16>, vector<144x128xf32> -> vector<144x128xf32>
    %5 = arith.maximumf %2, %4 : vector<144x128xf32>
    %c0_6 = arith.constant 0 : index
    %c0_7 = arith.constant 0 : index
    %6 = vector.load %arg3[%c0_6, %c0_7] : memref<144x25xbf16, #tpu.memory_space<vmem>>, vector<144x25xbf16>
    %cst_8 = arith.constant dense<0.000000e+00> : vector<144x128xf32>
    %7 = tpu.matmul %6, %0, %cst_8 {dimension_numbers = #tpu.dot_dimension_numbers<[1], [0], [0], [1], [0, 0, 1, 1], [], []>} : vector<144x25xbf16>, vector<25x128xbf16>, vector<144x128xf32> -> vector<144x128xf32>
    %c0_9 = arith.constant 0 : index
    %c0_10 = arith.constant 0 : index
    %8 = vector.load %arg4[%c0_9, %c0_10] : memref<144x25xbf16, #tpu.memory_space<vmem>>, vector<144x25xbf16>
    %cst_11 = arith.constant dense<0.000000e+00> : vector<144x128xf32>
    %9 = tpu.matmul %8, %0, %cst_11 {dimension_numbers = #tpu.dot_dimension_numbers<[1], [0], [0], [1], [0, 0, 1, 1], [], []>} : vector<144x25xbf16>, vector<25x128xbf16>, vector<144x128xf32> -> vector<144x128xf32>
    %10 = arith.maximumf %7, %9 : vector<144x128xf32>
    %11 = arith.maximumf %5, %10 : vector<144x128xf32>
    %c0_12 = arith.constant 0 : index
    %c0_13 = arith.constant 0 : index
    %12 = vector.load %arg6[%c0_12, %c0_13] : memref<1x128xf32, #tpu.memory_space<vmem>>, vector<1x128xf32>
    %13 = vector.broadcast %12 : vector<1x128xf32> to vector<144x128xf32>
    %14 = arith.addf %11, %13 : vector<144x128xf32>
    %cst_14 = arith.constant 0.000000e+00 : f32
    %15 = vector.broadcast %cst_14 : f32 to vector<144x128xf32>
    %16 = arith.maximumf %14, %15 : vector<144x128xf32>
    %17 = arith.truncf %16 : vector<144x128xf32> to vector<144x128xbf16>
    %c0_15 = arith.constant 0 : index
    %c0_16 = arith.constant 0 : index
    %18 = vector.load %arg7[%c0_15, %c0_16] : memref<144x128xbf16, #tpu.memory_space<vmem>>, vector<144x128xbf16>
    tpu.vector_store %arg7[%c0_15, %c0_16], %17 {strides = array<i32>} : memref<144x128xbf16, #tpu.memory_space<vmem>>, vector<144x128xbf16>,
    %cst_17 = arith.constant dense<0.000000e+00> : vector<128xf32>
    %19 = vector.multi_reduction <add>, %16, %cst_17 [0] : vector<144x128xf32> to vector<128xf32>
    %20 = vector.shape_cast %19 : vector<128xf32> to vector<1x128xf32>
    %c0_18 = arith.constant 0 : index
    %c0_19 = arith.constant 0 : index
    %21 = vector.load %arg8[%c0_18, %c0_19] : memref<8x128xf32, #tpu.memory_space<vmem>>, vector<1x128xf32>
    tpu.vector_store %arg8[%c0_18, %c0_19], %20 {strides = array<i32>} : memref<8x128xf32, #tpu.memory_space<vmem>>, vector<1x128xf32>,
    %22 = arith.mulf %16, %16 : vector<144x128xf32>
    %cst_20 = arith.constant dense<0.000000e+00> : vector<128xf32>
    %23 = vector.multi_reduction <add>, %22, %cst_20 [0] : vector<144x128xf32> to vector<128xf32>
    %24 = vector.shape_cast %23 : vector<128xf32> to vector<1x128xf32>
    %c1 = arith.constant 1 : index
    %c0_21 = arith.constant 0 : index
    %25 = vector.load %arg8[%c1, %c0_21] : memref<8x128xf32, #tpu.memory_space<vmem>>, vector<1x128xf32>
    tpu.vector_store %arg8[%c1, %c0_21], %24 {strides = array<i32>} : memref<8x128xf32, #tpu.memory_space<vmem>>, vector<1x128xf32>,
    %cst_22 = arith.constant 0.000000e+00 : f32
    %26 = vector.broadcast %cst_22 : f32 to vector<6x128xf32>
    %c2 = arith.constant 2 : index
    %c0_23 = arith.constant 0 : index
    %27 = vector.load %arg8[%c2, %c0_23] : memref<8x128xf32, #tpu.memory_space<vmem>>, vector<6x128xf32>
    tpu.vector_store %arg8[%c2, %c0_23], %26 {strides = array<i32>} : memref<8x128xf32, #tpu.memory_space<vmem>>, vector<6x128xf32>,
    return
  }
  func.func @transform_0(%arg0: i32) -> (i32, i32) {
    %c0_i32 = arith.constant 0 : i32
    %c0_i32_0 = arith.constant 0 : i32
    return %arg0, %c0_i32 : i32, i32
  }
  func.func @transform_1(%arg0: i32) -> (i32, i32) {
    %c0_i32 = arith.constant 0 : i32
    %c0_i32_0 = arith.constant 0 : i32
    return %arg0, %c0_i32 : i32, i32
  }
  func.func @transform_2(%arg0: i32) -> (i32, i32) {
    %c0_i32 = arith.constant 0 : i32
    %c0_i32_0 = arith.constant 0 : i32
    return %arg0, %c0_i32 : i32, i32
  }
  func.func @transform_3(%arg0: i32) -> (i32, i32) {
    %c0_i32 = arith.constant 0 : i32
    %c0_i32_0 = arith.constant 0 : i32
    return %arg0, %c0_i32 : i32, i32
  }
  func.func @transform_4(%arg0: i32) -> (i32, i32) {
    %c0_i32 = arith.constant 0 : i32
    %c0_i32_0 = arith.constant 0 : i32
    %c0_i32_1 = arith.constant 0 : i32
    return %c0_i32, %c0_i32_0 : i32, i32
  }
  func.func @transform_5(%arg0: i32) -> (i32, i32) {
    %c0_i32 = arith.constant 0 : i32
    %c0_i32_0 = arith.constant 0 : i32
    %c0_i32_1 = arith.constant 0 : i32
    return %c0_i32, %c0_i32_0 : i32, i32
  }
  func.func @transform_6(%arg0: i32) -> (i32, i32) {
    %c0_i32 = arith.constant 0 : i32
    %c0_i32_0 = arith.constant 0 : i32
    return %arg0, %c0_i32 : i32, i32
  }
  func.func @transform_7(%arg0: i32) -> (i32, i32) {
    %c0_i32 = arith.constant 0 : i32
    %c0_i32_0 = arith.constant 0 : i32
    return %arg0, %c0_i32 : i32, i32
  }
}

module attributes {stable_mosaic.version = 11 : i64} {
  func.func @_conv_stage_kernel(%arg0: i32, %arg1: memref<16x250xbf16, #tpu.memory_space<vmem>>, %arg2: memref<16x250xbf16, #tpu.memory_space<vmem>>, %arg3: memref<16x250xbf16, #tpu.memory_space<vmem>>, %arg4: memref<16x250xbf16, #tpu.memory_space<vmem>>, %arg5: memref<250x32xbf16, #tpu.memory_space<vmem>>, %arg6: memref<1x32xf32, #tpu.memory_space<vmem>>, %arg7: memref<16x32xbf16, #tpu.memory_space<vmem>>, %arg8: memref<8x32xf32, #tpu.memory_space<vmem>>) attributes {dimension_semantics = [#tpu.dimension_semantics<parallel>], iteration_bounds = array<i64: 2>, scalar_prefetch = 0 : i64, scratch_operands = 0 : i64, tpu.core_type = #tpu.core_type<tc>, window_params = [{transform_indices = @transform_0, window_bounds = array<i64: 16, 250>}, {transform_indices = @transform_1, window_bounds = array<i64: 16, 250>}, {transform_indices = @transform_2, window_bounds = array<i64: 16, 250>}, {transform_indices = @transform_3, window_bounds = array<i64: 16, 250>}, {pipeline_mode = #tpu.pipeline_mode<synchronous>, transform_indices = @transform_4, window_bounds = array<i64: 250, 32>}, {pipeline_mode = #tpu.pipeline_mode<synchronous>, transform_indices = @transform_5, window_bounds = array<i64: 1, 32>}, {transform_indices = @transform_6, window_bounds = array<i64: 16, 32>}, {transform_indices = @transform_7, window_bounds = array<i64: 8, 32>}]} {
    %c0 = arith.constant 0 : index
    %c0_0 = arith.constant 0 : index
    %0 = vector.load %arg5[%c0, %c0_0] : memref<250x32xbf16, #tpu.memory_space<vmem>>, vector<250x32xbf16>
    %c0_1 = arith.constant 0 : index
    %c0_2 = arith.constant 0 : index
    %1 = vector.load %arg1[%c0_1, %c0_2] : memref<16x250xbf16, #tpu.memory_space<vmem>>, vector<16x250xbf16>
    %cst = arith.constant dense<0.000000e+00> : vector<16x32xf32>
    %2 = tpu.matmul %1, %0, %cst {dimension_numbers = #tpu.dot_dimension_numbers<[1], [0], [0], [1], [0, 0, 1, 1], [], []>} : vector<16x250xbf16>, vector<250x32xbf16>, vector<16x32xf32> -> vector<16x32xf32>
    %c0_3 = arith.constant 0 : index
    %c0_4 = arith.constant 0 : index
    %3 = vector.load %arg2[%c0_3, %c0_4] : memref<16x250xbf16, #tpu.memory_space<vmem>>, vector<16x250xbf16>
    %cst_5 = arith.constant dense<0.000000e+00> : vector<16x32xf32>
    %4 = tpu.matmul %3, %0, %cst_5 {dimension_numbers = #tpu.dot_dimension_numbers<[1], [0], [0], [1], [0, 0, 1, 1], [], []>} : vector<16x250xbf16>, vector<250x32xbf16>, vector<16x32xf32> -> vector<16x32xf32>
    %5 = arith.maximumf %2, %4 : vector<16x32xf32>
    %c0_6 = arith.constant 0 : index
    %c0_7 = arith.constant 0 : index
    %6 = vector.load %arg3[%c0_6, %c0_7] : memref<16x250xbf16, #tpu.memory_space<vmem>>, vector<16x250xbf16>
    %cst_8 = arith.constant dense<0.000000e+00> : vector<16x32xf32>
    %7 = tpu.matmul %6, %0, %cst_8 {dimension_numbers = #tpu.dot_dimension_numbers<[1], [0], [0], [1], [0, 0, 1, 1], [], []>} : vector<16x250xbf16>, vector<250x32xbf16>, vector<16x32xf32> -> vector<16x32xf32>
    %c0_9 = arith.constant 0 : index
    %c0_10 = arith.constant 0 : index
    %8 = vector.load %arg4[%c0_9, %c0_10] : memref<16x250xbf16, #tpu.memory_space<vmem>>, vector<16x250xbf16>
    %cst_11 = arith.constant dense<0.000000e+00> : vector<16x32xf32>
    %9 = tpu.matmul %8, %0, %cst_11 {dimension_numbers = #tpu.dot_dimension_numbers<[1], [0], [0], [1], [0, 0, 1, 1], [], []>} : vector<16x250xbf16>, vector<250x32xbf16>, vector<16x32xf32> -> vector<16x32xf32>
    %10 = arith.maximumf %7, %9 : vector<16x32xf32>
    %11 = arith.maximumf %5, %10 : vector<16x32xf32>
    %c0_12 = arith.constant 0 : index
    %c0_13 = arith.constant 0 : index
    %12 = vector.load %arg6[%c0_12, %c0_13] : memref<1x32xf32, #tpu.memory_space<vmem>>, vector<1x32xf32>
    %13 = vector.broadcast %12 : vector<1x32xf32> to vector<16x32xf32>
    %14 = arith.addf %11, %13 : vector<16x32xf32>
    %cst_14 = arith.constant 0.000000e+00 : f32
    %15 = vector.broadcast %cst_14 : f32 to vector<16x32xf32>
    %16 = arith.maximumf %14, %15 : vector<16x32xf32>
    %17 = arith.truncf %16 : vector<16x32xf32> to vector<16x32xbf16>
    %c0_15 = arith.constant 0 : index
    %c0_16 = arith.constant 0 : index
    %18 = vector.load %arg7[%c0_15, %c0_16] : memref<16x32xbf16, #tpu.memory_space<vmem>>, vector<16x32xbf16>
    tpu.vector_store %arg7[%c0_15, %c0_16], %17 {strides = array<i32>} : memref<16x32xbf16, #tpu.memory_space<vmem>>, vector<16x32xbf16>,
    %cst_17 = arith.constant dense<0.000000e+00> : vector<32xf32>
    %19 = vector.multi_reduction <add>, %16, %cst_17 [0] : vector<16x32xf32> to vector<32xf32>
    %20 = vector.shape_cast %19 : vector<32xf32> to vector<1x32xf32>
    %c0_18 = arith.constant 0 : index
    %c0_19 = arith.constant 0 : index
    %21 = vector.load %arg8[%c0_18, %c0_19] : memref<8x32xf32, #tpu.memory_space<vmem>>, vector<1x32xf32>
    tpu.vector_store %arg8[%c0_18, %c0_19], %20 {strides = array<i32>} : memref<8x32xf32, #tpu.memory_space<vmem>>, vector<1x32xf32>,
    %22 = arith.mulf %16, %16 : vector<16x32xf32>
    %cst_20 = arith.constant dense<0.000000e+00> : vector<32xf32>
    %23 = vector.multi_reduction <add>, %22, %cst_20 [0] : vector<16x32xf32> to vector<32xf32>
    %24 = vector.shape_cast %23 : vector<32xf32> to vector<1x32xf32>
    %c1 = arith.constant 1 : index
    %c0_21 = arith.constant 0 : index
    %25 = vector.load %arg8[%c1, %c0_21] : memref<8x32xf32, #tpu.memory_space<vmem>>, vector<1x32xf32>
    tpu.vector_store %arg8[%c1, %c0_21], %24 {strides = array<i32>} : memref<8x32xf32, #tpu.memory_space<vmem>>, vector<1x32xf32>,
    %cst_22 = arith.constant 0.000000e+00 : f32
    %26 = vector.broadcast %cst_22 : f32 to vector<6x32xf32>
    %c2 = arith.constant 2 : index
    %c0_23 = arith.constant 0 : index
    %27 = vector.load %arg8[%c2, %c0_23] : memref<8x32xf32, #tpu.memory_space<vmem>>, vector<6x32xf32>
    tpu.vector_store %arg8[%c2, %c0_23], %26 {strides = array<i32>} : memref<8x32xf32, #tpu.memory_space<vmem>>, vector<6x32xf32>,
    return
  }
  func.func @transform_0(%arg0: i32) -> (i32, i32) {
    %c0_i32 = arith.constant 0 : i32
    %c0_i32_0 = arith.constant 0 : i32
    return %arg0, %c0_i32 : i32, i32
  }
  func.func @transform_1(%arg0: i32) -> (i32, i32) {
    %c0_i32 = arith.constant 0 : i32
    %c0_i32_0 = arith.constant 0 : i32
    return %arg0, %c0_i32 : i32, i32
  }
  func.func @transform_2(%arg0: i32) -> (i32, i32) {
    %c0_i32 = arith.constant 0 : i32
    %c0_i32_0 = arith.constant 0 : i32
    return %arg0, %c0_i32 : i32, i32
  }
  func.func @transform_3(%arg0: i32) -> (i32, i32) {
    %c0_i32 = arith.constant 0 : i32
    %c0_i32_0 = arith.constant 0 : i32
    return %arg0, %c0_i32 : i32, i32
  }
  func.func @transform_4(%arg0: i32) -> (i32, i32) {
    %c0_i32 = arith.constant 0 : i32
    %c0_i32_0 = arith.constant 0 : i32
    %c0_i32_1 = arith.constant 0 : i32
    return %c0_i32, %c0_i32_0 : i32, i32
  }
  func.func @transform_5(%arg0: i32) -> (i32, i32) {
    %c0_i32 = arith.constant 0 : i32
    %c0_i32_0 = arith.constant 0 : i32
    %c0_i32_1 = arith.constant 0 : i32
    return %c0_i32, %c0_i32_0 : i32, i32
  }
  func.func @transform_6(%arg0: i32) -> (i32, i32) {
    %c0_i32 = arith.constant 0 : i32
    %c0_i32_0 = arith.constant 0 : i32
    return %arg0, %c0_i32 : i32, i32
  }
  func.func @transform_7(%arg0: i32) -> (i32, i32) {
    %c0_i32 = arith.constant 0 : i32
    %c0_i32_0 = arith.constant 0 : i32
    return %arg0, %c0_i32 : i32, i32
  }
}

module attributes {stable_mosaic.version = 11 : i64} {
  func.func @_head_kernel(%arg0: i32, %arg1: memref<2x512xbf16, #tpu.memory_space<vmem>>, %arg2: memref<512x128xbf16, #tpu.memory_space<vmem>>, %arg3: memref<1x128xf32, #tpu.memory_space<vmem>>, %arg4: memref<128x128xbf16, #tpu.memory_space<vmem>>, %arg5: memref<1x128xf32, #tpu.memory_space<vmem>>, %arg6: memref<2x128xf32, #tpu.memory_space<vmem>>) attributes {dimension_semantics = [#tpu.dimension_semantics<parallel>], iteration_bounds = array<i64: 1>, scalar_prefetch = 0 : i64, scratch_operands = 0 : i64, tpu.core_type = #tpu.core_type<tc>, window_params = [{transform_indices = @transform_0, window_bounds = array<i64: 2, 512>}, {pipeline_mode = #tpu.pipeline_mode<synchronous>, transform_indices = @transform_1, window_bounds = array<i64: 512, 128>}, {pipeline_mode = #tpu.pipeline_mode<synchronous>, transform_indices = @transform_2, window_bounds = array<i64: 1, 128>}, {pipeline_mode = #tpu.pipeline_mode<synchronous>, transform_indices = @transform_3, window_bounds = array<i64: 128, 128>}, {pipeline_mode = #tpu.pipeline_mode<synchronous>, transform_indices = @transform_4, window_bounds = array<i64: 1, 128>}, {transform_indices = @transform_5, window_bounds = array<i64: 2, 128>}]} {
    %c0 = arith.constant 0 : index
    %c0_0 = arith.constant 0 : index
    %0 = vector.load %arg1[%c0, %c0_0] : memref<2x512xbf16, #tpu.memory_space<vmem>>, vector<2x512xbf16>
    %c0_1 = arith.constant 0 : index
    %c0_2 = arith.constant 0 : index
    %1 = vector.load %arg2[%c0_1, %c0_2] : memref<512x128xbf16, #tpu.memory_space<vmem>>, vector<512x128xbf16>
    %cst = arith.constant dense<0.000000e+00> : vector<2x128xf32>
    %2 = tpu.matmul %0, %1, %cst {dimension_numbers = #tpu.dot_dimension_numbers<[1], [0], [0], [1], [0, 0, 1, 1], [], []>} : vector<2x512xbf16>, vector<512x128xbf16>, vector<2x128xf32> -> vector<2x128xf32>
    %c0_3 = arith.constant 0 : index
    %c0_4 = arith.constant 0 : index
    %3 = vector.load %arg3[%c0_3, %c0_4] : memref<1x128xf32, #tpu.memory_space<vmem>>, vector<1x128xf32>
    %4 = vector.broadcast %3 : vector<1x128xf32> to vector<2x128xf32>
    %5 = arith.addf %2, %4 : vector<2x128xf32>
    %cst_5 = arith.constant 0.000000e+00 : f32
    %6 = vector.broadcast %cst_5 : f32 to vector<2x128xf32>
    %7 = arith.maximumf %5, %6 : vector<2x128xf32>
    %8 = arith.truncf %7 : vector<2x128xf32> to vector<2x128xbf16>
    %c0_6 = arith.constant 0 : index
    %c0_7 = arith.constant 0 : index
    %9 = vector.load %arg4[%c0_6, %c0_7] : memref<128x128xbf16, #tpu.memory_space<vmem>>, vector<128x128xbf16>
    %cst_8 = arith.constant dense<0.000000e+00> : vector<2x128xf32>
    %10 = tpu.matmul %8, %9, %cst_8 {dimension_numbers = #tpu.dot_dimension_numbers<[1], [0], [0], [1], [0, 0, 1, 1], [], []>} : vector<2x128xbf16>, vector<128x128xbf16>, vector<2x128xf32> -> vector<2x128xf32>
    %c0_9 = arith.constant 0 : index
    %c0_10 = arith.constant 0 : index
    %11 = vector.load %arg5[%c0_9, %c0_10] : memref<1x128xf32, #tpu.memory_space<vmem>>, vector<1x128xf32>
    %12 = vector.broadcast %11 : vector<1x128xf32> to vector<2x128xf32>
    %13 = arith.addf %10, %12 : vector<2x128xf32>
    %14 = tpu.iota {dimensions = array<i32: 1>} : vector<2x128xi32>
    %c10_i32 = arith.constant 10 : i32
    %15 = vector.broadcast %c10_i32 : i32 to vector<2x128xi32>
    %16 = arith.cmpi slt, %14, %15 : vector<2x128xi32>
    %cst_11 = arith.constant -1.000000e+30 : f32
    %17 = vector.broadcast %cst_11 : f32 to vector<2x128xf32>
    %18 = arith.select %16, %13, %17 : vector<2x128xi1>, vector<2x128xf32>
    %cst_12 = arith.constant dense<0xFF800000> : vector<2xf32>
    %19 = vector.multi_reduction <maximumf>, %18, %cst_12 [1] : vector<2x128xf32> to vector<2xf32>
    %20 = vector.shape_cast %19 : vector<2xf32> to vector<2x1xf32>
    %21 = vector.broadcast %20 : vector<2x1xf32> to vector<2x128xf32>
    %22 = arith.subf %18, %21 : vector<2x128xf32>
    %23 = math.exp %22 : vector<2x128xf32>
    %cst_13 = arith.constant dense<0.000000e+00> : vector<2xf32>
    %24 = vector.multi_reduction <add>, %23, %cst_13 [1] : vector<2x128xf32> to vector<2xf32>
    %25 = vector.shape_cast %24 : vector<2xf32> to vector<2x1xf32>
    %26 = math.log %25 : vector<2x1xf32>
    %27 = vector.broadcast %26 : vector<2x1xf32> to vector<2x128xf32>
    %28 = arith.subf %22, %27 : vector<2x128xf32>
    %c0_14 = arith.constant 0 : index
    %c0_15 = arith.constant 0 : index
    %29 = vector.load %arg6[%c0_14, %c0_15] : memref<2x128xf32, #tpu.memory_space<vmem>>, vector<2x128xf32>
    tpu.vector_store %arg6[%c0_14, %c0_15], %28 {strides = array<i32>} : memref<2x128xf32, #tpu.memory_space<vmem>>, vector<2x128xf32>,
    return
  }
  func.func @transform_0(%arg0: i32) -> (i32, i32) {
    %c0_i32 = arith.constant 0 : i32
    %c0_i32_0 = arith.constant 0 : i32
    return %arg0, %c0_i32 : i32, i32
  }
  func.func @transform_1(%arg0: i32) -> (i32, i32) {
    %c0_i32 = arith.constant 0 : i32
    %c0_i32_0 = arith.constant 0 : i32
    %c0_i32_1 = arith.constant 0 : i32
    return %c0_i32, %c0_i32_0 : i32, i32
  }
  func.func @transform_2(%arg0: i32) -> (i32, i32) {
    %c0_i32 = arith.constant 0 : i32
    %c0_i32_0 = arith.constant 0 : i32
    %c0_i32_1 = arith.constant 0 : i32
    return %c0_i32, %c0_i32_0 : i32, i32
  }
  func.func @transform_3(%arg0: i32) -> (i32, i32) {
    %c0_i32 = arith.constant 0 : i32
    %c0_i32_0 = arith.constant 0 : i32
    %c0_i32_1 = arith.constant 0 : i32
    return %c0_i32, %c0_i32_0 : i32, i32
  }
  func.func @transform_4(%arg0: i32) -> (i32, i32) {
    %c0_i32 = arith.constant 0 : i32
    %c0_i32_0 = arith.constant 0 : i32
    %c0_i32_1 = arith.constant 0 : i32
    return %c0_i32, %c0_i32_0 : i32, i32
  }
  func.func @transform_5(%arg0: i32) -> (i32, i32) {
    %c0_i32 = arith.constant 0 : i32
    %c0_i32_0 = arith.constant 0 : i32
    return %arg0, %c0_i32 : i32, i32
  }
}

</mosaic_0001>

<llo_original>
// kernel: mnist_forward.3
$region0: #{mnist_forward.3}
  #allocation0 [shape = 'u32[]', space=smem, size = 0x4, offset = 0x4, fixed_abs, tag = 'smem constant byte address 0x4 - core index']
  #allocation1 [shape = 'u32[144,128]{1,0:T(1,128)}', space=vmem, size = 0x12000, scoped, tag = 'internal scratch']
  %s0 = inlined_call_operand.vmem [shape: bf16[288,25], index: 0, kind: input, shape index: {}]
  %s1 = inlined_call_operand.vmem [shape: bf16[288,25], index: 1, kind: input, shape index: {}]
  %s2 = inlined_call_operand.vmem [shape: bf16[288,25], index: 2, kind: input, shape index: {}]
  %s3 = inlined_call_operand.vmem [shape: bf16[288,25], index: 3, kind: input, shape index: {}]
  %s4 = inlined_call_operand.vmem [shape: bf16[25,128], index: 4, kind: input, shape index: {}]
  %s5 = inlined_call_operand.vmem [shape: f32[1,128], index: 5, kind: input, shape index: {}]
  %s6 = inlined_call_operand.vmem [shape: bf16[288,128], index: 6, kind: output, shape index: {0}]
  %s7 = inlined_call_operand.vmem [shape: f32[16,128], index: 7, kind: output, shape index: {1}]
  %8 = xla_tuple %s6, %s7
  %s9 = sld [smem:[#allocation0]]
  $region65: #{mnist_forward.3} parent=0
    _
  %s11 = ssub.s32 1, %s9
  %s12 = scalar_select 0, %s11, %s9
  loop: start=0, step=1, limit=4
  $region2: #{mnist_forward.3} parent=0 // loop_pre_header
    _
  $region3: #{mnist_forward.3} parent=0 // loop_header
    %s14 = sphi 0, %s18
    %p15 = scmp.ge.s32.totalorder %s14, 4
    %s24 = sphi 0, %s26
    %s27 = sphi 0, %s24
    %s28 = sphi 0, %s27
    %s44 = sphi 0, %s28
    %s50 = sphi 0, %s52
    %s53 = sphi 0, %s50
    %s54 = sphi 0, %s53
    %s70 = sphi 0, %s54
    %s76 = sphi 0, %s78
    %s79 = sphi 0, %s76
    %s80 = sphi 0, %s79
    %s96 = sphi 0, %s80
    %s102 = sphi 0, %s104
    %s105 = sphi 0, %s102
    %s106 = sphi 0, %s105
    %s122 = sphi 0, %s106
    %s126 = sphi 0, %s126
    %s128 = sphi 0, %s126
    %s129 = sphi 0, %s128
    %s143 = sphi 0, %s129
    %s147 = sphi 0, %s147
    %s149 = sphi 0, %s147
    %s150 = sphi 0, %s149
    %s164 = sphi 0, %s150
    %s170 = sphi 0, %s172
    %s173 = sphi 0, %s170
    %s174 = sphi 0, %s173
    %s190 = sphi 0, %s174
    %s196 = sphi 0, %s198
    %s199 = sphi 0, %s196
    %s200 = sphi 0, %s199
    %s216 = sphi 0, %s200
  $region4: #{mnist_forward.3} parent=0 // loop_header_branch
    %17 = sbr.rel (%p15) target = $region8
  $region5: #{mnist_forward.3} parent=0 // loop_body
    %s19 = ssub.s32 %s14, 1
    %s20 = ssub.s32 %s14, 2
    %s21 = sadd.s32 %s14, 1
    %s22 = ssub.s32 %s14, %s21
    %p23 = scmp.eq.s32.totalorder %s22, 0
    %s25 = sadd.s32 %s24, 1
    %s26 = scalar_select %p23, %s24, %s25
    %p29 = pneg %p23
    %p30 = scmp.eq.s32.totalorder %s14, 1
    %p31 = por %p29, %p30
    %p32 = scmp.ne.s32.totalorder %s24, %s27
    %p33 = scmp.eq.s32.totalorder %s14, 0
    %p34 = por %p32, %p33
    %p35 = scmp.ne.s32.totalorder %s24, %s27
    %p36 = scmp.eq.s32.totalorder %s19, 1
    %p37 = por %p35, %p36
    %p38 = scmp.ne.s32.totalorder %s27, %s28
    %p39 = scmp.eq.s32.totalorder %s19, 0
    %p40 = por %p38, %p39
    %p41 = scmp.ne.s32.totalorder %s27, %s28
    %p42 = scmp.eq.s32.totalorder %s20, 1
    %p43 = por %p41, %p42
    %p45 = scmp.ne.s32.totalorder %s28, %s44
    %p46 = scmp.eq.s32.totalorder %s20, 0
    %p47 = por %p45, %p46
    %s48 = ssub.s32 %s14, %s21
    %p49 = scmp.eq.s32.totalorder %s48, 0
    %s51 = sadd.s32 %s50, 1
    %s52 = scalar_select %p49, %s50, %s51
    %p55 = pneg %p49
    %p56 = scmp.eq.s32.totalorder %s14, 1
    %p57 = por %p55, %p56
    %p58 = scmp.ne.s32.totalorder %s50, %s53
    %p59 = scmp.eq.s32.totalorder %s14, 0
    %p60 = por %p58, %p59
    %p61 = scmp.ne.s32.totalorder %s50, %s53
    %p62 = scmp.eq.s32.totalorder %s19, 1
    %p63 = por %p61, %p62
    %p64 = scmp.ne.s32.totalorder %s53, %s54
    %p65 = scmp.eq.s32.totalorder %s19, 0
    %p66 = por %p64, %p65
    %p67 = scmp.ne.s32.totalorder %s53, %s54
    %p68 = scmp.eq.s32.totalorder %s20, 1
    %p69 = por %p67, %p68
    %p71 = scmp.ne.s32.totalorder %s54, %s70
    %p72 = scmp.eq.s32.totalorder %s20, 0
    %p73 = por %p71, %p72
    %s74 = ssub.s32 %s14, %s21
    %p75 = scmp.eq.s32.totalorder %s74, 0
    %s77 = sadd.s32 %s76, 1
    %s78 = scalar_select %p75, %s76, %s77
    %p81 = pneg %p75
    %p82 = scmp.eq.s32.totalorder %s14, 1
    %p83 = por %p81, %p82
    %p84 = scmp.ne.s32.totalorder %s76, %s79
    %p85 = scmp.eq.s32.totalorder %s14, 0
    %p86 = por %p84, %p85
    %p87 = scmp.ne.s32.totalorder %s76, %s79
    %p88 = scmp.eq.s32.totalorder %s19, 1
    %p89 = por %p87, %p88
    %p90 = scmp.ne.s32.totalorder %s79, %s80
    %p91 = scmp.eq.s32.totalorder %s19, 0
    %p92 = por %p90, %p91
    %p93 = scmp.ne.s32.totalorder %s79, %s80
    %p94 = scmp.eq.s32.totalorder %s20, 1
    %p95 = por %p93, %p94
    %p97 = scmp.ne.s32.totalorder %s80, %s96
    %p98 = scmp.eq.s32.totalorder %s20, 0
    %p99 = por %p97, %p98
    %s100 = ssub.s32 %s14, %s21
    %p101 = scmp.eq.s32.totalorder %s100, 0
    %s103 = sadd.s32 %s102, 1
    %s104 = scalar_select %p101, %s102, %s103
    %p107 = pneg %p101
    %p108 = scmp.eq.s32.totalorder %s14, 1
    %p109 = por %p107, %p108
    %p110 = scmp.ne.s32.totalorder %s102, %s105
    %p111 = scmp.eq.s32.totalorder %s14, 0
    %p112 = por %p110, %p111
    %p113 = scmp.ne.s32.totalorder %s102, %s105
    %p114 = scmp.eq.s32.totalorder %s19, 1
    %p115 = por %p113, %p114
    %p116 = scmp.ne.s32.totalorder %s105, %s106
    %p117 = scmp.eq.s32.totalorder %s19, 0
    %p118 = por %p116, %p117
    %p119 = scmp.ne.s32.totalorder %s105, %s106
    %p120 = scmp.eq.s32.totalorder %s20, 1
    %p121 = por %p119, %p120
    %p123 = scmp.ne.s32.totalorder %s106, %s122
    %p124 = scmp.eq.s32.totalorder %s20, 0
    %p125 = por %p123, %p124
    %s127 = sadd.s32 %s126, 1
    %p130 = scmp.eq.s32.totalorder %s14, 1
    %p131 = scmp.ne.s32.totalorder %s126, %s128
    %p132 = scmp.eq.s32.totalorder %s14, 0
    %p133 = por %p131, %p132
    %p134 = scmp.ne.s32.totalorder %s126, %s128
    %p135 = scmp.eq.s32.totalorder %s19, 1
    %p136 = por %p134, %p135
    %p137 = scmp.ne.s32.totalorder %s128, %s129
    %p138 = scmp.eq.s32.totalorder %s19, 0
    %p139 = por %p137, %p138
    %p140 = scmp.ne.s32.totalorder %s128, %s129
    %p141 = scmp.eq.s32.totalorder %s20, 1
    %p142 = por %p140, %p141
    %p144 = scmp.ne.s32.totalorder %s129, %s143
    %p145 = scmp.eq.s32.totalorder %s20, 0
    %p146 = por %p144, %p145
    %s148 = sadd.s32 %s147, 1
    %p151 = scmp.eq.s32.totalorder %s14, 1
    %p152 = scmp.ne.s32.totalorder %s147, %s149
    %p153 = scmp.eq.s32.totalorder %s14, 0
    %p154 = por %p152, %p153
    %p155 = scmp.ne.s32.totalorder %s147, %s149
    %p156 = scmp.eq.s32.totalorder %s19, 1
    %p157 = por %p155, %p156
    %p158 = scmp.ne.s32.totalorder %s149, %s150
    %p159 = scmp.eq.s32.totalorder %s19, 0
    %p160 = por %p158, %p159
    %p161 = scmp.ne.s32.totalorder %s149, %s150
    %p162 = scmp.eq.s32.totalorder %s20, 1
    %p163 = por %p161, %p162
    %p165 = scmp.ne.s32.totalorder %s150, %s164
    %p166 = scmp.eq.s32.totalorder %s20, 0
    %p167 = por %p165, %p166
    %s168 = ssub.s32 %s14, %s21
    %p169 = scmp.eq.s32.totalorder %s168, 0
    %s171 = sadd.s32 %s170, 1
    %s172 = scalar_select %p169, %s170, %s171
    %p175 = pneg %p169
    %p176 = scmp.eq.s32.totalorder %s14, 1
    %p177 = por %p175, %p176
    %p178 = scmp.ne.s32.totalorder %s170, %s173
    %p179 = scmp.eq.s32.totalorder %s14, 0
    %p180 = por %p178, %p179
    %p181 = scmp.ne.s32.totalorder %s170, %s173
    %p182 = scmp.eq.s32.totalorder %s19, 1
    %p183 = por %p181, %p182
    %p184 = scmp.ne.s32.totalorder %s173, %s174
    %p185 = scmp.eq.s32.totalorder %s19, 0
    %p186 = por %p184, %p185
    %p187 = scmp.ne.s32.totalorder %s173, %s174
    %p188 = scmp.eq.s32.totalorder %s20, 1
    %p189 = por %p187, %p188
    %p191 = scmp.ne.s32.totalorder %s174, %s190
    %p192 = scmp.eq.s32.totalorder %s20, 0
    %p193 = por %p191, %p192
    %s194 = ssub.s32 %s14, %s21
    %p195 = scmp.eq.s32.totalorder %s194, 0
    %s197 = sadd.s32 %s196, 1
    %s198 = scalar_select %p195, %s196, %s197
    %p201 = pneg %p195
    %p202 = scmp.eq.s32.totalorder %s14, 1
    %p203 = por %p201, %p202
    %p204 = scmp.ne.s32.totalorder %s196, %s199
    %p205 = scmp.eq.s32.totalorder %s14, 0
    %p206 = por %p204, %p205
    %p207 = scmp.ne.s32.totalorder %s196, %s199
    %p208 = scmp.eq.s32.totalorder %s19, 1
    %p209 = por %p207, %p208
    %p210 = scmp.ne.s32.totalorder %s199, %s200
    %p211 = scmp.eq.s32.totalorder %s19, 0
    %p212 = por %p210, %p211
    %p213 = scmp.ne.s32.totalorder %s199, %s200
    %p214 = scmp.eq.s32.totalorder %s20, 1
    %p215 = por %p213, %p214
    %p217 = scmp.ne.s32.totalorder %s200, %s216
    %p218 = scmp.eq.s32.totalorder %s20, 0
    %p219 = por %p217, %p218
    %p220 = scmp.le.s32.totalorder 1, %s14
    %p221 = scmp.lt.s32.totalorder %s14, 3
    %p222 = pnand %p220, %p221
    %p223 = pneg %p222
    // Predicated region
    $region9: #{mnist_forward.3} parent=5 // pred_check
      _
    $region10: #{mnist_forward.3} parent=5 // pred_check_branch
      %225 = sbr.rel (%p222) target = $region12
    $region11: #{mnist_forward.3} parent=5 // pred_region
      %s226 = ssub.s32 %s14, 1
      // Predicated region
      $region13: #{mnist_forward.3} parent=11 // pred_check
        %p227 = pneg %p139
      $region14: #{mnist_forward.3} parent=11 // pred_check_branch
        %229 = sbr.rel (%p227) target = $region16
      $region15: #{mnist_forward.3} parent=11 // pred_region
        _
      $region16: #{mnist_forward.3} parent=11 // pred_fallthru
        _
      // Predicated region
      $region17: #{mnist_forward.3} parent=11 // pred_check
        %p230 = pneg %p160
      $region18: #{mnist_forward.3} parent=11 // pred_check_branch
        %232 = sbr.rel (%p230) target = $region20
      $region19: #{mnist_forward.3} parent=11 // pred_region
        _
      $region20: #{mnist_forward.3} parent=11 // pred_fallthru
        _
    $region12: #{mnist_forward.3} parent=5 // pred_fallthru
      _
    %p233 = scmp.lt.s32.totalorder %s14, 2
    // Predicated region
    $region21: #{mnist_forward.3} parent=5 // pred_check
      %p234 = pneg %p233
    $region22: #{mnist_forward.3} parent=5 // pred_check_branch
      %236 = sbr.rel (%p234) target = $region24
    $region23: #{mnist_forward.3} parent=5 // pred_region
      // Predicated region
      $region25: #{mnist_forward.3} parent=23 // pred_check
        %p237 = pneg %p34
      $region26: #{mnist_forward.3} parent=23 // pred_check_branch
        %239 = sbr.rel (%p237) target = $region28
      $region27: #{mnist_forward.3} parent=23 // pred_region
        %s240 = smul.u32 18, %s14
        %p241 = scmp.lt.s32.totalorder %s240, 35
        %s242 = scalar_select %p241, %s240, 35
        %s243 = smul.addr %s242, 4
        %s244 = scalar_lea.vmem %s0, %s243
        %s245 = smul.u32 18, %s14
      $region28: #{mnist_forward.3} parent=23 // pred_fallthru
        _
      // Predicated region
      $region29: #{mnist_forward.3} parent=23 // pred_check
        %p246 = pneg %p60
      $region30: #{mnist_forward.3} parent=23 // pred_check_branch
        %248 = sbr.rel (%p246) target = $region32
      $region31: #{mnist_forward.3} parent=23 // pred_region
        %s249 = smul.u32 18, %s14
        %p250 = scmp.lt.s32.totalorder %s249, 35
        %s251 = scalar_select %p250, %s249, 35
        %s252 = smul.addr %s251, 4
        %s253 = scalar_lea.vmem %s1, %s252
        %s254 = smul.u32 18, %s14
      $region32: #{mnist_forward.3} parent=23 // pred_fallthru
        _
      // Predicated region
      $region33: #{mnist_forward.3} parent=23 // pred_check
        %p255 = pneg %p86
      $region34: #{mnist_forward.3} parent=23 // pred_check_branch
        %257 = sbr.rel (%p255) target = $region36
      $region35: #{mnist_forward.3} parent=23 // pred_region
        %s258 = smul.u32 18, %s14
        %p259 = scmp.lt.s32.totalorder %s258, 35
        %s260 = scalar_select %p259, %s258, 35
        %s261 = smul.addr %s260, 4
        %s262 = scalar_lea.vmem %s2, %s261
        %s263 = smul.u32 18, %s14
      $region36: #{mnist_forward.3} parent=23 // pred_fallthru
        _
      // Predicated region
      $region37: #{mnist_forward.3} parent=23 // pred_check
        %p264 = pneg %p112
      $region38: #{mnist_forward.3} parent=23 // pred_check_branch
        %266 = sbr.rel (%p264) target = $region40
      $region39: #{mnist_forward.3} parent=23 // pred_region
        %s267 = smul.u32 18, %s14
        %p268 = scmp.lt.s32.totalorder %s267, 35
        %s269 = scalar_select %p268, %s267, 35
        %s270 = smul.addr %s269, 4
        %s271 = scalar_lea.vmem %s3, %s270
        %s272 = smul.u32 18, %s14
      $region40: #{mnist_forward.3} parent=23 // pred_fallthru
        _
    $region24: #{mnist_forward.3} parent=5 // pred_fallthru
      _
    %p273 = scmp.le.s32.totalorder 1, %s14
    %p274 = scmp.lt.s32.totalorder %s14, 3
    %p275 = pnand %p273, %p274
    %p276 = pneg %p275
    // Predicated region
    $region41: #{mnist_forward.3} parent=5 // pred_check
      _
    $region42: #{mnist_forward.3} parent=5 // pred_check_branch
      %278 = sbr.rel (%p275) target = $region44
    $region43: #{mnist_forward.3} parent=5 // pred_region
      %s279 = ssub.s32 %s14, 1
      %s280 = smul.u32 18, %s19
      %p281 = scmp.lt.s32.totalorder %s280, 35
      %s282 = scalar_select %p281, %s280, 35
      %s283 = smul.addr %s282, 4
      %s284 = scalar_lea.vmem %s0, %s283
      %p285 = pneg %p40
      %p286 = pneg %p37
      %s287 = smul.u32 18, %s19
      %p288 = scmp.lt.s32.totalorder %s287, 35
      %s289 = scalar_select %p288, %s287, 35
      %s290 = smul.addr %s289, 4
      %s291 = scalar_lea.vmem %s1, %s290
      %p292 = pneg %p66
      %p293 = pneg %p63
      %s294 = smul.u32 18, %s19
      %p295 = scmp.lt.s32.totalorder %s294, 35
      %s296 = scalar_select %p295, %s294, 35
      %s297 = smul.addr %s296, 4
      %s298 = scalar_lea.vmem %s2, %s297
      %p299 = pneg %p92
      %p300 = pneg %p89
      %s301 = smul.u32 18, %s19
      %p302 = scmp.lt.s32.totalorder %s301, 35
      %s303 = scalar_select %p302, %s301, 35
      %s304 = smul.addr %s303, 4
      %s305 = scalar_lea.vmem %s3, %s304
      %p306 = pneg %p118
      %p307 = pneg %p115
      %p308 = pneg %p139
      %p309 = pneg %p136
      %p310 = pneg %p160
      %p311 = pneg %p157
      %p312 = pneg %p186
      %p313 = pneg %p183
      %s314 = smul.u32 18, %s19
      %p315 = scmp.lt.s32.totalorder %s314, 35
      %s316 = scalar_select %p315, %s314, 35
      %s317 = smul.addr %s316, 4
      %s318 = scalar_lea.vmem %s6, %s317
      %p319 = pneg %p212
      %p320 = pneg %p209
      %p321 = scmp.lt.s32.totalorder %s19, 1
      %s322 = scalar_select %p321, %s19, 1
      %s323 = smul.addr %s322, 8
      %s324 = scalar_lea.vmem %s7, %s323
      %s325 = smul.u32 18, %s19
      %p326 = scmp.lt.s32.totalorder %s325, 35
      %s327 = scalar_select %p326, %s325, 35
      %s328 = smul.addr %s327, 4
      %s329 = scalar_lea.vmem %s0, %s328
      %s330 = smul.u32 18, %s19
      %s331 = smul.u32 18, %s19
      %p332 = scmp.lt.s32.totalorder %s331, 35
      %s333 = scalar_select %p332, %s331, 35
      %s334 = smul.addr %s333, 4
      %s335 = scalar_lea.vmem %s1, %s334
      %s336 = smul.u32 18, %s19
      %s337 = smul.u32 18, %s19
      %p338 = scmp.lt.s32.totalorder %s337, 35
      %s339 = scalar_select %p338, %s337, 35
      %s340 = smul.addr %s339, 4
      %s341 = scalar_lea.vmem %s2, %s340
      %s342 = smul.u32 18, %s19
      %s343 = smul.u32 18, %s19
      %p344 = scmp.lt.s32.totalorder %s343, 35
      %s345 = scalar_select %p344, %s343, 35
      %s346 = smul.addr %s345, 4
      %s347 = scalar_lea.vmem %s3, %s346
      %s348 = smul.u32 18, %s19
      %s349 = smul.u32 18, %s19
      %p350 = scmp.lt.s32.totalorder %s349, 35
      %s351 = scalar_select %p350, %s349, 35
      %s352 = smul.addr %s351, 4
      %s353 = scalar_lea.vmem %s6, %s352
      %s354 = smul.u32 18, %s19
      %p355 = scmp.lt.s32.totalorder %s19, 1
      %s356 = scalar_select %p355, %s19, 1
      %s357 = smul.addr %s356, 8
      %s358 = scalar_lea.vmem %s7, %s357
      %v360 = vld [vmem:[%s4] sm:$0xf]
      %v361 = vld [vmem:[%s4 + $0x4] sm:$0xf]
      %v362 = vld [vmem:[%s4 + $0x8] sm:$0xf]
      %v363 = vld [vmem:[%s4 + $0xc] sm:$0x1]
      %v364 = vld [vmem:[%s329] sm:$0xf]
      %v365 = vld [vmem:[%s329 + $0x4] sm:$0xf]
      %v366 = vld [vmem:[%s329 + $0x8] sm:$0xf]
      %v367 = vld [vmem:[%s329 + $0xc] sm:$0xf]
      %v368 = vld [vmem:[%s329 + $0x10] sm:$0xf]
      %v369 = vld [vmem:[%s329 + $0x14] sm:$0xf]
      %v370 = vld [vmem:[%s329 + $0x18] sm:$0xf]
      %v371 = vld [vmem:[%s329 + $0x1c] sm:$0xf]
      %v372 = vld [vmem:[%s329 + $0x20] sm:$0xf]
      %v373 = vld [vmem:[%s329 + $0x24] sm:$0xf]
      %v374 = vld [vmem:[%s329 + $0x28] sm:$0xf]
      %v375 = vld [vmem:[%s329 + $0x2c] sm:$0xf]
      %v376 = vld [vmem:[%s329 + $0x30] sm:$0xf]
      %v377 = vld [vmem:[%s329 + $0x34] sm:$0xf]
      %v378 = vld [vmem:[%s329 + $0x38] sm:$0xf]
      %v379 = vld [vmem:[%s329 + $0x3c] sm:$0xf]
      %v380 = vld [vmem:[%s329 + $0x40] sm:$0xf]
      %v381 = vld [vmem:[%s329 + $0x44] sm:$0xf]
      %v400 = vunpack.c.l.b16 %v364
      %v401 = vunpack.c.l.b16 %v365
      %v402 = vunpack.c.l.b16 %v366
      %v403 = vunpack.c.l.b16 %v367
      %v404 = vunpack.c.l.b16 %v368
      %v405 = vunpack.c.l.b16 %v369
      %v406 = vunpack.c.l.b16 %v370
      %v407 = vunpack.c.l.b16 %v371
      %v408 = vunpack.c.l.b16 %v372
      %v409 = vunpack.c.l.b16 %v373
      %v410 = vunpack.c.l.b16 %v374
      %v411 = vunpack.c.l.b16 %v375
      %v412 = vunpack.c.l.b16 %v376
      %v413 = vunpack.c.l.b16 %v377
      %v414 = vunpack.c.l.b16 %v378
      %v415 = vunpack.c.l.b16 %v379
      %v416 = vunpack.c.l.b16 %v380
      %v417 = vunpack.c.l.b16 %v381
      %v418 = vpack.c.b16 %v401, %v400
      %v419 = vpack.c.b16 %v403, %v402
      %v420 = vpack.c.b16 %v405, %v404
      %v421 = vpack.c.b16 %v407, %v406
      %v422 = vpack.c.b16 %v409, %v408
      %v423 = vpack.c.b16 %v411, %v410
      %v424 = vpack.c.b16 %v413, %v412
      %v425 = vpack.c.b16 %v415, %v414
      %v426 = vpack.c.b16 %v417, %v416
      %v431 = vunpack.c.l.b16 %v360
      %v432 = vunpack.c.l.b16 %v361
      %v433 = vunpack.c.l.b16 %v362
      %v434 = vunpack.c.l.b16 %v363
      %v435 = vpack.c.b16 %v432, %v431
      %v436 = vpack.c.b16 %v434, %v433
      %vm438 = vcmask 203776
      %v440 = vsel %vm438, %v418, 0
      %v443 = vsel %vm438, %v419, 0
      %v446 = vsel %vm438, %v420, 0
      %v449 = vsel %vm438, %v421, 0
      %v452 = vsel %vm438, %v422, 0
      %v455 = vsel %vm438, %v423, 0
      %v458 = vsel %vm438, %v424, 0
      %v461 = vsel %vm438, %v425, 0
      %v464 = vsel %vm438, %v426, 0
      %vm466 = vcmask 1043456
      %vm467 = vcmask 1044480
      %v468 = vsel %vm466, 4294967295, 65535
      %v469 = vsel %vm467, %v468, 0
      %v471 = vand.u32 %v436, %v469
      %473 = vmatprep.subr.bf16.mxu0 0
      %474 = vmatpush1.bf16.msra.mxu0 %v435
      %475 = vmatprep.subr.bf16.mxu0 0
      %476 = vmatpush1.bf16.msra.mxu0 %v471
      %477 = vmatprep.subr.bf16.mxu0 0
      %478 = vmatpush1.bf16.msra.mxu0 0
      %479 = vmatprep.subr.bf16.mxu0 0
      %480 = vmatpush1.bf16.msra.mxu0 0
      %481 = vmatprep.subr.bf16.mxu0 0
      %482 = vmatpush1.bf16.msra.mxu0 0
      %483 = vmatprep.subr.bf16.mxu0 0
      %484 = vmatpush1.bf16.msra.mxu0 0
      %485 = vmatprep.subr.bf16.mxu0 0
      %486 = vmatpush1.bf16.msra.mxu0 0
      %487 = vmatprep.subr.bf16.mxu0 0
      %488 = vmatpush1.bf16.msra.mxu0 0
      %489 = vmatprep.subr.bf16.mxu0 0
      %490 = vmatpush1.bf16.msra.mxu0 0
      %491 = vmatprep.subr.bf16.mxu0 0
      %492 = vmatpush1.bf16.msra.mxu0 0
      %493 = vmatprep.subr.bf16.mxu0 0
      %494 = vmatpush1.bf16.msra.mxu0 0
      %495 = vmatprep.subr.bf16.mxu0 0
      %496 = vmatpush1.bf16.msra.mxu0 0
      %497 = vmatprep.subr.bf16.mxu0 0
      %498 = vmatpush1.bf16.msra.mxu0 0
      %499 = vmatprep.subr.bf16.mxu0 0
      %500 = vmatpush1.bf16.msra.mxu0 0
      %501 = vmatprep.subr.bf16.mxu0 0
      %502 = vmatpush1.bf16.msra.mxu0 0
      %503 = vmatprep.subr.bf16.mxu0 0
      %504 = vmatpush1.bf16.msra.mxu0 0
      %505 = vmatprep.mubr.bf16.mxu0 0
      %506 = vmatmul.mubr.bf16.gmra.mrb[0].mxu0 %v440
      %v507 = vpop.f32.mrb[0].mxu0
      %v508 = vadd.f32 0.0, %v507
      %v509 = vpop.f32.mrb[0].mxu0
      %v510 = vpop.f32.mrb[0].mxu0
      %v511 = vadd.f32 0.0, %v510
      %v512 = vpop.f32.mrb[0].mxu0
      %513 = vmatprep.mubr.bf16.mxu0 0
      %514 = vmatmul.mubr.bf16.gmra.mrb[0].mxu0 %v443
      %v515 = vpop.f32.mrb[0].mxu0
      %v516 = vadd.f32 0.0, %v515
      %v517 = vpop.f32.mrb[0].mxu0
      %v518 = vpop.f32.mrb[0].mxu0
      %v519 = vadd.f32 0.0, %v518
      %v520 = vpop.f32.mrb[0].mxu0
      %521 = vmatprep.mubr.bf16.mxu0 0
      %522 = vmatmul.mubr.bf16.gmra.mrb[0].mxu0 %v446
      %v523 = vpop.f32.mrb[0].mxu0
      %v524 = vadd.f32 0.0, %v523
      %v525 = vpop.f32.mrb[0].mxu0
      %v526 = vpop.f32.mrb[0].mxu0
      %v527 = vadd.f32 0.0, %v526
      %v528 = vpop.f32.mrb[0].mxu0
      %529 = vmatprep.mubr.bf16.mxu0 0
      %530 = vmatmul.mubr.bf16.gmra.mrb[0].mxu0 %v449
      %v531 = vpop.f32.mrb[0].mxu0
      %v532 = vadd.f32 0.0, %v531
      %v533 = vpop.f32.mrb[0].mxu0
      %v534 = vpop.f32.mrb[0].mxu0
      %v535 = vadd.f32 0.0, %v534
      %v536 = vpop.f32.mrb[0].mxu0
      %537 = vmatprep.mubr.bf16.mxu0 0
      %538 = vmatmul.mubr.bf16.gmra.mrb[0].mxu0 %v452
      %v539 = vpop.f32.mrb[0].mxu0
      %v540 = vadd.f32 0.0, %v539
      %v541 = vpop.f32.mrb[0].mxu0
      %v542 = vpop.f32.mrb[0].mxu0
      %v543 = vadd.f32 0.0, %v542
      %v544 = vpop.f32.mrb[0].mxu0
      %545 = vmatprep.mubr.bf16.mxu0 0
      %546 = vmatmul.mubr.bf16.gmra.mrb[0].mxu0 %v455
      %v547 = vpop.f32.mrb[0].mxu0
      %v548 = vadd.f32 0.0, %v547
      %v549 = vpop.f32.mrb[0].mxu0
      %v550 = vpop.f32.mrb[0].mxu0
      %v551 = vadd.f32 0.0, %v550
      %v552 = vpop.f32.mrb[0].mxu0
      %553 = vmatprep.mubr.bf16.mxu0 0
      %554 = vmatmul.mubr.bf16.gmra.mrb[0].mxu0 %v458
      %v555 = vpop.f32.mrb[0].mxu0
      %v556 = vadd.f32 0.0, %v555
      %v557 = vpop.f32.mrb[0].mxu0
      %v558 = vpop.f32.mrb[0].mxu0
      %v559 = vadd.f32 0.0, %v558
      %v560 = vpop.f32.mrb[0].mxu0
      %561 = vmatprep.mubr.bf16.mxu0 0
      %562 = vmatmul.mubr.bf16.gmra.mrb[0].mxu0 %v461
      %v563 = vpop.f32.mrb[0].mxu0
      %v564 = vadd.f32 0.0, %v563
      %v565 = vpop.f32.mrb[0].mxu0
      %v566 = vpop.f32.mrb[0].mxu0
      %v567 = vadd.f32 0.0, %v566
      %v568 = vpop.f32.mrb[0].mxu0
      %569 = vmatprep.mubr.bf16.mxu0 0
      %570 = vmatmul.mubr.bf16.gmra.mrb[0].mxu0 %v464
      %v571 = vpop.f32.mrb[0].mxu0
      %v572 = vadd.f32 0.0, %v571
      %v573 = vpop.f32.mrb[0].mxu0
      %v574 = vpop.f32.mrb[0].mxu0
      %v575 = vadd.f32 0.0, %v574
      %v576 = vpop.f32.mrb[0].mxu0
      %577 = vdwg.mxu0
      %v578 = vld [vmem:[%s335] sm:$0xf]
      %v579 = vld [vmem:[%s335 + $0x4] sm:$0xf]
      %v580 = vld [vmem:[%s335 + $0x8] sm:$0xf]
      %v581 = vld [vmem:[%s335 + $0xc] sm:$0xf]
      %v582 = vld [vmem:[%s335 + $0x10] sm:$0xf]
      %v583 = vld [vmem:[%s335 + $0x14] sm:$0xf]
      %v584 = vld [vmem:[%s335 + $0x18] sm:$0xf]
      %v585 = vld [vmem:[%s335 + $0x1c] sm:$0xf]
      %v586 = vld [vmem:[%s335 + $0x20] sm:$0xf]
      %v587 = vld [vmem:[%s335 + $0x24] sm:$0xf]
      %v588 = vld [vmem:[%s335 + $0x28] sm:$0xf]
      %v589 = vld [vmem:[%s335 + $0x2c] sm:$0xf]
      %v590 = vld [vmem:[%s335 + $0x30] sm:$0xf]
      %v591 = vld [vmem:[%s335 + $0x34] sm:$0xf]
      %v592 = vld [vmem:[%s335 + $0x38] sm:$0xf]
      %v593 = vld [vmem:[%s335 + $0x3c] sm:$0xf]
      %v594 = vld [vmem:[%s335 + $0x40] sm:$0xf]
      %v595 = vld [vmem:[%s335 + $0x44] sm:$0xf]
      %v614 = vunpack.c.l.b16 %v578
      %v615 = vunpack.c.l.b16 %v579
      %v616 = vunpack.c.l.b16 %v580
      %v617 = vunpack.c.l.b16 %v581
      %v618 = vunpack.c.l.b16 %v582
      %v619 = vunpack.c.l.b16 %v583
      %v620 = vunpack.c.l.b16 %v584
      %v621 = vunpack.c.l.b16 %v585
      %v622 = vunpack.c.l.b16 %v586
      %v623 = vunpack.c.l.b16 %v587
      %v624 = vunpack.c.l.b16 %v588
      %v625 = vunpack.c.l.b16 %v589
      %v626 = vunpack.c.l.b16 %v590
      %v627 = vunpack.c.l.b16 %v591
      %v628 = vunpack.c.l.b16 %v592
      %v629 = vunpack.c.l.b16 %v593
      %v630 = vunpack.c.l.b16 %v594
      %v631 = vunpack.c.l.b16 %v595
      %v632 = vpack.c.b16 %v615, %v614
      %v633 = vpack.c.b16 %v617, %v616
      %v634 = vpack.c.b16 %v619, %v618
      %v635 = vpack.c.b16 %v621, %v620
      %v636 = vpack.c.b16 %v623, %v622
      %v637 = vpack.c.b16 %v625, %v624
      %v638 = vpack.c.b16 %v627, %v626
      %v639 = vpack.c.b16 %v629, %v628
      %v640 = vpack.c.b16 %v631, %v630
      %v642 = vsel %vm438, %v632, 0
      %v645 = vsel %vm438, %v633, 0
      %v648 = vsel %vm438, %v634, 0
      %v651 = vsel %vm438, %v635, 0
      %v654 = vsel %vm438, %v636, 0
      %v657 = vsel %vm438, %v637, 0
      %v660 = vsel %vm438, %v638, 0
      %v663 = vsel %vm438, %v639, 0
      %v666 = vsel %vm438, %v640, 0
      %668 = vmatprep.subr.bf16.mxu0 0
      %669 = vmatpush1.bf16.msra.mxu0 %v435
      %670 = vmatprep.subr.bf16.mxu0 0
      %671 = vmatpush1.bf16.msra.mxu0 %v471
      %672 = vmatprep.subr.bf16.mxu0 0
      %673 = vmatpush1.bf16.msra.mxu0 0
      %674 = vmatprep.subr.bf16.mxu0 0
      %675 = vmatpush1.bf16.msra.mxu0 0
      %676 = vmatprep.subr.bf16.mxu0 0
      %677 = vmatpush1.bf16.msra.mxu0 0
      %678 = vmatprep.subr.bf16.mxu0 0
      %679 = vmatpush1.bf16.msra.mxu0 0
      %680 = vmatprep.subr.bf16.mxu0 0
      %681 = vmatpush1.bf16.msra.mxu0 0
      %682 = vmatprep.subr.bf16.mxu0 0
      %683 = vmatpush1.bf16.msra.mxu0 0
      %684 = vmatprep.subr.bf16.mxu0 0
      %685 = vmatpush1.bf16.msra.mxu0 0
      %686 = vmatprep.subr.bf16.mxu0 0
      %687 = vmatpush1.bf16.msra.mxu0 0
      %688 = vmatprep.subr.bf16.mxu0 0
      %689 = vmatpush1.bf16.msra.mxu0 0
      %690 = vmatprep.subr.bf16.mxu0 0
      %691 = vmatpush1.bf16.msra.mxu0 0
      %692 = vmatprep.subr.bf16.mxu0 0
      %693 = vmatpush1.bf16.msra.mxu0 0
      %694 = vmatprep.subr.bf16.mxu0 0
      %695 = vmatpush1.bf16.msra.mxu0 0
      %696 = vmatprep.subr.bf16.mxu0 0
      %697 = vmatpush1.bf16.msra.mxu0 0
      %698 = vmatprep.subr.bf16.mxu0 0
      %699 = vmatpush1.bf16.msra.mxu0 0
      %700 = vmatprep.mubr.bf16.mxu0 0
      %701 = vmatmul.mubr.bf16.gmra.mrb[0].mxu0 %v642
      %v702 = vpop.f32.mrb[0].mxu0
      %v703 = vadd.f32 0.0, %v702
      %v704 = vpop.f32.mrb[0].mxu0
      %v705 = vpop.f32.mrb[0].mxu0
      %v706 = vadd.f32 0.0, %v705
      %v707 = vpop.f32.mrb[0].mxu0
      %708 = vmatprep.mubr.bf16.mxu0 0
      %709 = vmatmul.mubr.bf16.gmra.mrb[0].mxu0 %v645
      %v710 = vpop.f32.mrb[0].mxu0
      %v711 = vadd.f32 0.0, %v710
      %v712 = vpop.f32.mrb[0].mxu0
      %v713 = vpop.f32.mrb[0].mxu0
      %v714 = vadd.f32 0.0, %v713
      %v715 = vpop.f32.mrb[0].mxu0
      %716 = vmatprep.mubr.bf16.mxu0 0
      %717 = vmatmul.mubr.bf16.gmra.mrb[0].mxu0 %v648
      %v718 = vpop.f32.mrb[0].mxu0
      %v719 = vadd.f32 0.0, %v718
      %v720 = vpop.f32.mrb[0].mxu0
      %v721 = vpop.f32.mrb[0].mxu0
      %v722 = vadd.f32 0.0, %v721
      %v723 = vpop.f32.mrb[0].mxu0
      %724 = vmatprep.mubr.bf16.mxu0 0
      %725 = vmatmul.mubr.bf16.gmra.mrb[0].mxu0 %v651
      %v726 = vpop.f32.mrb[0].mxu0
      %v727 = vadd.f32 0.0, %v726
      %v728 = vpop.f32.mrb[0].mxu0
      %v729 = vpop.f32.mrb[0].mxu0
      %v730 = vadd.f32 0.0, %v729
      %v731 = vpop.f32.mrb[0].mxu0
      %732 = vmatprep.mubr.bf16.mxu0 0
      %733 = vmatmul.mubr.bf16.gmra.mrb[0].mxu0 %v654
      %v734 = vpop.f32.mrb[0].mxu0
      %v735 = vadd.f32 0.0, %v734
      %v736 = vpop.f32.mrb[0].mxu0
      %v737 = vpop.f32.mrb[0].mxu0
      %v738 = vadd.f32 0.0, %v737
      %v739 = vpop.f32.mrb[0].mxu0
      %740 = vmatprep.mubr.bf16.mxu0 0
      %741 = vmatmul.mubr.bf16.gmra.mrb[0].mxu0 %v657
      %v742 = vpop.f32.mrb[0].mxu0
      %v743 = vadd.f32 0.0, %v742
      %v744 = vpop.f32.mrb[0].mxu0
      %v745 = vpop.f32.mrb[0].mxu0
      %v746 = vadd.f32 0.0, %v745
      %v747 = vpop.f32.mrb[0].mxu0
      %748 = vmatprep.mubr.bf16.mxu0 0
      %749 = vmatmul.mubr.bf16.gmra.mrb[0].mxu0 %v660
      %v750 = vpop.f32.mrb[0].mxu0
      %v751 = vadd.f32 0.0, %v750
      %v752 = vpop.f32.mrb[0].mxu0
      %v753 = vpop.f32.mrb[0].mxu0
      %v754 = vadd.f32 0.0, %v753
      %v755 = vpop.f32.mrb[0].mxu0
      %756 = vmatprep.mubr.bf16.mxu0 0
      %757 = vmatmul.mubr.bf16.gmra.mrb[0].mxu0 %v663
      %v758 = vpop.f32.mrb[0].mxu0
      %v759 = vadd.f32 0.0, %v758
      %v760 = vpop.f32.mrb[0].mxu0
      %v761 = vpop.f32.mrb[0].mxu0
      %v762 = vadd.f32 0.0, %v761
      %v763 = vpop.f32.mrb[0].mxu0
      %764 = vmatprep.mubr.bf16.mxu0 0
      %765 = vmatmul.mubr.bf16.gmra.mrb[0].mxu0 %v666
      %v766 = vpop.f32.mrb[0].mxu0
      %v767 = vadd.f32 0.0, %v766
      %v768 = vpop.f32.mrb[0].mxu0
      %v769 = vpop.f32.mrb[0].mxu0
      %v770 = vadd.f32 0.0, %v769
      %v771 = vpop.f32.mrb[0].mxu0
      %772 = vdwg.mxu0
      %v773 = vmax.f32 %v508, %v703
      %v774 = vmax.f32 %v511, %v706
      %v775 = vmax.f32 %v516, %v711
      %v776 = vmax.f32 %v519, %v714
      %v777 = vmax.f32 %v524, %v719
      %v778 = vmax.f32 %v527, %v722
      %v779 = vmax.f32 %v532, %v727
      %v780 = vmax.f32 %v535, %v730
      %v781 = vmax.f32 %v540, %v735
      %v782 = vmax.f32 %v543, %v738
      %v783 = vmax.f32 %v548, %v743
      %v784 = vmax.f32 %v551, %v746
      %v785 = vmax.f32 %v556, %v751
      %v786 = vmax.f32 %v559, %v754
      %v787 = vmax.f32 %v564, %v759
      %v788 = vmax.f32 %v567, %v762
      %v789 = vmax.f32 %v572, %v767
      %v790 = vmax.f32 %v575, %v770
      %v791 = vld [vmem:[%s341] sm:$0xf]
      %v792 = vld [vmem:[%s341 + $0x4] sm:$0xf]
      %v793 = vld [vmem:[%s341 + $0x8] sm:$0xf]
      %v794 = vld [vmem:[%s341 + $0xc] sm:$0xf]
      %v795 = vld [vmem:[%s341 + $0x10] sm:$0xf]
      %v796 = vld [vmem:[%s341 + $0x14] sm:$0xf]
      %v797 = vld [vmem:[%s341 + $0x18] sm:$0xf]
      %v798 = vld [vmem:[%s341 + $0x1c] sm:$0xf]
      %v799 = vld [vmem:[%s341 + $0x20] sm:$0xf]
      %v800 = vld [vmem:[%s341 + $0x24] sm:$0xf]
      %v801 = vld [vmem:[%s341 + $0x28] sm:$0xf]
      %v802 = vld [vmem:[%s341 + $0x2c] sm:$0xf]
      %v803 = vld [vmem:[%s341 + $0x30] sm:$0xf]
      %v804 = vld [vmem:[%s341 + $0x34] sm:$0xf]
      %v805 = vld [vmem:[%s341 + $0x38] sm:$0xf]
      %v806 = vld [vmem:[%s341 + $0x3c] sm:$0xf]
      %v807 = vld [vmem:[%s341 + $0x40] sm:$0xf]
      %v808 = vld [vmem:[%s341 + $0x44] sm:$0xf]
      %v827 = vunpack.c.l.b16 %v791
      %v828 = vunpack.c.l.b16 %v792
      %v829 = vunpack.c.l.b16 %v793
      %v830 = vunpack.c.l.b16 %v794
      %v831 = vunpack.c.l.b16 %v795
      %v832 = vunpack.c.l.b16 %v796
      %v833 = vunpack.c.l.b16 %v797
      %v834 = vunpack.c.l.b16 %v798
      %v835 = vunpack.c.l.b16 %v799
      %v836 = vunpack.c.l.b16 %v800
      %v837 = vunpack.c.l.b16 %v801
      %v838 = vunpack.c.l.b16 %v802
      %v839 = vunpack.c.l.b16 %v803
      %v840 = vunpack.c.l.b16 %v804
      %v841 = vunpack.c.l.b16 %v805
      %v842 = vunpack.c.l.b16 %v806
      %v843 = vunpack.c.l.b16 %v807
      %v844 = vunpack.c.l.b16 %v808
      %v845 = vpack.c.b16 %v828, %v827
      %v846 = vpack.c.b16 %v830, %v829
      %v847 = vpack.c.b16 %v832, %v831
      %v848 = vpack.c.b16 %v834, %v833
      %v849 = vpack.c.b16 %v836, %v835
      %v850 = vpack.c.b16 %v838, %v837
      %v851 = vpack.c.b16 %v840, %v839
      %v852 = vpack.c.b16 %v842, %v841
      %v853 = vpack.c.b16 %v844, %v843
      %v855 = vsel %vm438, %v845, 0
      %v858 = vsel %vm438, %v846, 0
      %v861 = vsel %vm438, %v847, 0
      %v864 = vsel %vm438, %v848, 0
      %v867 = vsel %vm438, %v849, 0
      %v870 = vsel %vm438, %v850, 0
      %v873 = vsel %vm438, %v851, 0
      %v876 = vsel %vm438, %v852, 0
      %v879 = vsel %vm438, %v853, 0
      %881 = vmatprep.subr.bf16.mxu0 0
      %882 = vmatpush1.bf16.msra.mxu0 %v435
      %883 = vmatprep.subr.bf16.mxu0 0
      %884 = vmatpush1.bf16.msra.mxu0 %v471
      %885 = vmatprep.subr.bf16.mxu0 0
      %886 = vmatpush1.bf16.msra.mxu0 0
      %887 = vmatprep.subr.bf16.mxu0 0
      %888 = vmatpush1.bf16.msra.mxu0 0
      %889 = vmatprep.subr.bf16.mxu0 0
      %890 = vmatpush1.bf16.msra.mxu0 0
      %891 = vmatprep.subr.bf16.mxu0 0
      %892 = vmatpush1.bf16.msra.mxu0 0
      %893 = vmatprep.subr.bf16.mxu0 0
      %894 = vmatpush1.bf16.msra.mxu0 0
      %895 = vmatprep.subr.bf16.mxu0 0
      %896 = vmatpush1.bf16.msra.mxu0 0
      %897 = vmatprep.subr.bf16.mxu0 0
      %898 = vmatpush1.bf16.msra.mxu0 0
      %899 = vmatprep.subr.bf16.mxu0 0
      %900 = vmatpush1.bf16.msra.mxu0 0
      %901 = vmatprep.subr.bf16.mxu0 0
      %902 = vmatpush1.bf16.msra.mxu0 0
      %903 = vmatprep.subr.bf16.mxu0 0
      %904 = vmatpush1.bf16.msra.mxu0 0
      %905 = vmatprep.subr.bf16.mxu0 0
      %906 = vmatpush1.bf16.msra.mxu0 0
      %907 = vmatprep.subr.bf16.mxu0 0
      %908 = vmatpush1.bf16.msra.mxu0 0
      %909 = vmatprep.subr.bf16.mxu0 0
      %910 = vmatpush1.bf16.msra.mxu0 0
      %911 = vmatprep.subr.bf16.mxu0 0
      %912 = vmatpush1.bf16.msra.mxu0 0
      %913 = vmatprep.mubr.bf16.mxu0 0
      %914 = vmatmul.mubr.bf16.gmra.mrb[0].mxu0 %v855
      %v915 = vpop.f32.mrb[0].mxu0
      %v916 = vadd.f32 0.0, %v915
      %v917 = vpop.f32.mrb[0].mxu0
      %v918 = vpop.f32.mrb[0].mxu0
      %v919 = vadd.f32 0.0, %v918
      %v920 = vpop.f32.mrb[0].mxu0
      %921 = vmatprep.mubr.bf16.mxu0 0
      %922 = vmatmul.mubr.bf16.gmra.mrb[0].mxu0 %v858
      %v923 = vpop.f32.mrb[0].mxu0
      %v924 = vadd.f32 0.0, %v923
      %v925 = vpop.f32.mrb[0].mxu0
      %v926 = vpop.f32.mrb[0].mxu0
      %v927 = vadd.f32 0.0, %v926
      %v928 = vpop.f32.mrb[0].mxu0
      %929 = vmatprep.mubr.bf16.mxu0 0
      %930 = vmatmul.mubr.bf16.gmra.mrb[0].mxu0 %v861
      %v931 = vpop.f32.mrb[0].mxu0
      %v932 = vadd.f32 0.0, %v931
      %v933 = vpop.f32.mrb[0].mxu0
      %v934 = vpop.f32.mrb[0].mxu0
      %v935 = vadd.f32 0.0, %v934
      %v936 = vpop.f32.mrb[0].mxu0
      %937 = vmatprep.mubr.bf16.mxu0 0
      %938 = vmatmul.mubr.bf16.gmra.mrb[0].mxu0 %v864
      %v939 = vpop.f32.mrb[0].mxu0
      %v940 = vadd.f32 0.0, %v939
      %v941 = vpop.f32.mrb[0].mxu0
      %v942 = vpop.f32.mrb[0].mxu0
      %v943 = vadd.f32 0.0, %v942
      %v944 = vpop.f32.mrb[0].mxu0
      %945 = vmatprep.mubr.bf16.mxu0 0
      %946 = vmatmul.mubr.bf16.gmra.mrb[0].mxu0 %v867
      %v947 = vpop.f32.mrb[0].mxu0
      %v948 = vadd.f32 0.0, %v947
      %v949 = vpop.f32.mrb[0].mxu0
      %v950 = vpop.f32.mrb[0].mxu0
      %v951 = vadd.f32 0.0, %v950
      %v952 = vpop.f32.mrb[0].mxu0
      %953 = vmatprep.mubr.bf16.mxu0 0
      %954 = vmatmul.mubr.bf16.gmra.mrb[0].mxu0 %v870
      %v955 = vpop.f32.mrb[0].mxu0
      %v956 = vadd.f32 0.0, %v955
      %v957 = vpop.f32.mrb[0].mxu0
      %v958 = vpop.f32.mrb[0].mxu0
      %v959 = vadd.f32 0.0, %v958
      %v960 = vpop.f32.mrb[0].mxu0
      %961 = vmatprep.mubr.bf16.mxu0 0
      %962 = vmatmul.mubr.bf16.gmra.mrb[0].mxu0 %v873
      %v963 = vpop.f32.mrb[0].mxu0
      %v964 = vadd.f32 0.0, %v963
      %v965 = vpop.f32.mrb[0].mxu0
      %v966 = vpop.f32.mrb[0].mxu0
      %v967 = vadd.f32 0.0, %v966
      %v968 = vpop.f32.mrb[0].mxu0
      %969 = vmatprep.mubr.bf16.mxu0 0
      %970 = vmatmul.mubr.bf16.gmra.mrb[0].mxu0 %v876
      %v971 = vpop.f32.mrb[0].mxu0
      %v972 = vadd.f32 0.0, %v971
      %v973 = vpop.f32.mrb[0].mxu0
      %v974 = vpop.f32.mrb[0].mxu0
      %v975 = vadd.f32 0.0, %v974
      %v976 = vpop.f32.mrb[0].mxu0
      %977 = vmatprep.mubr.bf16.mxu0 0
      %978 = vmatmul.mubr.bf16.gmra.mrb[0].mxu0 %v879
      %v979 = vpop.f32.mrb[0].mxu0
      %v980 = vadd.f32 0.0, %v979
      %v981 = vpop.f32.mrb[0].mxu0
      %v982 = vpop.f32.mrb[0].mxu0
      %v983 = vadd.f32 0.0, %v982
      %v984 = vpop.f32.mrb[0].mxu0
      %985 = vdwg.mxu0
      %v986 = vld [vmem:[%s347] sm:$0xf]
      %v987 = vld [vmem:[%s347 + $0x4] sm:$0xf]
      %v988 = vld [vmem:[%s347 + $0x8] sm:$0xf]
      %v989 = vld [vmem:[%s347 + $0xc] sm:$0xf]
      %v990 = vld [vmem:[%s347 + $0x10] sm:$0xf]
      %v991 = vld [vmem:[%s347 + $0x14] sm:$0xf]
      %v992 = vld [vmem:[%s347 + $0x18] sm:$0xf]
      %v993 = vld [vmem:[%s347 + $0x1c] sm:$0xf]
      %v994 = vld [vmem:[%s347 + $0x20] sm:$0xf]
      %v995 = vld [vmem:[%s347 + $0x24] sm:$0xf]
      %v996 = vld [vmem:[%s347 + $0x28] sm:$0xf]
      %v997 = vld [vmem:[%s347 + $0x2c] sm:$0xf]
      %v998 = vld [vmem:[%s347 + $0x30] sm:$0xf]
      %v999 = vld [vmem:[%s347 + $0x34] sm:$0xf]
      %v1000 = vld [vmem:[%s347 + $0x38] sm:$0xf]
      %v1001 = vld [vmem:[%s347 + $0x3c] sm:$0xf]
      %v1002 = vld [vmem:[%s347 + $0x40] sm:$0xf]
      %v1003 = vld [vmem:[%s347 + $0x44] sm:$0xf]
      %v1022 = vunpack.c.l.b16 %v986
      %v1023 = vunpack.c.l.b16 %v987
      %v1024 = vunpack.c.l.b16 %v988
      %v1025 = vunpack.c.l.b16 %v989
      %v1026 = vunpack.c.l.b16 %v990
      %v1027 = vunpack.c.l.b16 %v991
      %v1028 = vunpack.c.l.b16 %v992
      %v1029 = vunpack.c.l.b16 %v993
      %v1030 = vunpack.c.l.b16 %v994
      %v1031 = vunpack.c.l.b16 %v995
      %v1032 = vunpack.c.l.b16 %v996
      %v1033 = vunpack.c.l.b16 %v997
      %v1034 = vunpack.c.l.b16 %v998
      %v1035 = vunpack.c.l.b16 %v999
      %v1036 = vunpack.c.l.b16 %v1000
      %v1037 = vunpack.c.l.b16 %v1001
      %v1038 = vunpack.c.l.b16 %v1002
      %v1039 = vunpack.c.l.b16 %v1003
      %v1040 = vpack.c.b16 %v1023, %v1022
      %v1041 = vpack.c.b16 %v1025, %v1024
      %v1042 = vpack.c.b16 %v1027, %v1026
      %v1043 = vpack.c.b16 %v1029, %v1028
      %v1044 = vpack.c.b16 %v1031, %v1030
      %v1045 = vpack.c.b16 %v1033, %v1032
      %v1046 = vpack.c.b16 %v1035, %v1034
      %v1047 = vpack.c.b16 %v1037, %v1036
      %v1048 = vpack.c.b16 %v1039, %v1038
      %v1050 = vsel %vm438, %v1040, 0
      %v1053 = vsel %vm438, %v1041, 0
      %v1056 = vsel %vm438, %v1042, 0
      %v1059 = vsel %vm438, %v1043, 0
      %v1062 = vsel %vm438, %v1044, 0
      %v1065 = vsel %vm438, %v1045, 0
      %v1068 = vsel %vm438, %v1046, 0
      %v1071 = vsel %vm438, %v1047, 0
      %v1074 = vsel %vm438, %v1048, 0
      %1076 = vmatprep.subr.bf16.mxu0 0
      %1077 = vmatpush1.bf16.msra.mxu0 %v435
      %1078 = vmatprep.subr.bf16.mxu0 0
      %1079 = vmatpush1.bf16.msra.mxu0 %v471
      %1080 = vmatprep.subr.bf16.mxu0 0
      %1081 = vmatpush1.bf16.msra.mxu0 0
      %1082 = vmatprep.subr.bf16.mxu0 0
      %1083 = vmatpush1.bf16.msra.mxu0 0
      %1084 = vmatprep.subr.bf16.mxu0 0
      %1085 = vmatpush1.bf16.msra.mxu0 0
      %1086 = vmatprep.subr.bf16.mxu0 0
      %1087 = vmatpush1.bf16.msra.mxu0 0
      %1088 = vmatprep.subr.bf16.mxu0 0
      %1089 = vmatpush1.bf16.msra.mxu0 0
      %1090 = vmatprep.subr.bf16.mxu0 0
      %1091 = vmatpush1.bf16.msra.mxu0 0
      %1092 = vmatprep.subr.bf16.mxu0 0
      %1093 = vmatpush1.bf16.msra.mxu0 0
      %1094 = vmatprep.subr.bf16.mxu0 0
      %1095 = vmatpush1.bf16.msra.mxu0 0
      %1096 = vmatprep.subr.bf16.mxu0 0
      %1097 = vmatpush1.bf16.msra.mxu0 0
      %1098 = vmatprep.subr.bf16.mxu0 0
      %1099 = vmatpush1.bf16.msra.mxu0 0
      %1100 = vmatprep.subr.bf16.mxu0 0
      %1101 = vmatpush1.bf16.msra.mxu0 0
      %1102 = vmatprep.subr.bf16.mxu0 0
      %1103 = vmatpush1.bf16.msra.mxu0 0
      %1104 = vmatprep.subr.bf16.mxu0 0
      %1105 = vmatpush1.bf16.msra.mxu0 0
      %1106 = vmatprep.subr.bf16.mxu0 0
      %1107 = vmatpush1.bf16.msra.mxu0 0
      %1108 = vmatprep.mubr.bf16.mxu0 0
      %1109 = vmatmul.mubr.bf16.gmra.mrb[0].mxu0 %v1050
      %v1110 = vpop.f32.mrb[0].mxu0
      %v1111 = vadd.f32 0.0, %v1110
      %v1112 = vpop.f32.mrb[0].mxu0
      %v1113 = vpop.f32.mrb[0].mxu0
      %v1114 = vadd.f32 0.0, %v1113
      %v1115 = vpop.f32.mrb[0].mxu0
      %1116 = vmatprep.mubr.bf16.mxu0 0
      %1117 = vmatmul.mubr.bf16.gmra.mrb[0].mxu0 %v1053
      %v1118 = vpop.f32.mrb[0].mxu0
      %v1119 = vadd.f32 0.0, %v1118
      %v1120 = vpop.f32.mrb[0].mxu0
      %v1121 = vpop.f32.mrb[0].mxu0
      %v1122 = vadd.f32 0.0, %v1121
      %v1123 = vpop.f32.mrb[0].mxu0
      %1124 = vmatprep.mubr.bf16.mxu0 0
      %1125 = vmatmul.mubr.bf16.gmra.mrb[0].mxu0 %v1056
      %v1126 = vpop.f32.mrb[0].mxu0
      %v1127 = vadd.f32 0.0, %v1126
      %v1128 = vpop.f32.mrb[0].mxu0
      %v1129 = vpop.f32.mrb[0].mxu0
      %v1130 = vadd.f32 0.0, %v1129
      %v1131 = vpop.f32.mrb[0].mxu0
      %1132 = vmatprep.mubr.bf16.mxu0 0
      %1133 = vmatmul.mubr.bf16.gmra.mrb[0].mxu0 %v1059
      %v1134 = vpop.f32.mrb[0].mxu0
      %v1135 = vadd.f32 0.0, %v1134
      %v1136 = vpop.f32.mrb[0].mxu0
      %v1137 = vpop.f32.mrb[0].mxu0
      %v1138 = vadd.f32 0.0, %v1137
      %v1139 = vpop.f32.mrb[0].mxu0
      %1140 = vmatprep.mubr.bf16.mxu0 0
      %1141 = vmatmul.mubr.bf16.gmra.mrb[0].mxu0 %v1062
      %v1142 = vpop.f32.mrb[0].mxu0
      %v1143 = vadd.f32 0.0, %v1142
      %v1144 = vpop.f32.mrb[0].mxu0
      %v1145 = vpop.f32.mrb[0].mxu0
      %v1146 = vadd.f32 0.0, %v1145
      %v1147 = vpop.f32.mrb[0].mxu0
      %1148 = vmatprep.mubr.bf16.mxu0 0
      %1149 = vmatmul.mubr.bf16.gmra.mrb[0].mxu0 %v1065
      %v1150 = vpop.f32.mrb[0].mxu0
      %v1151 = vadd.f32 0.0, %v1150
      %v1152 = vpop.f32.mrb[0].mxu0
      %v1153 = vpop.f32.mrb[0].mxu0
      %v1154 = vadd.f32 0.0, %v1153
      %v1155 = vpop.f32.mrb[0].mxu0
      %1156 = vmatprep.mubr.bf16.mxu0 0
      %1157 = vmatmul.mubr.bf16.gmra.mrb[0].mxu0 %v1068
      %v1158 = vpop.f32.mrb[0].mxu0
      %v1159 = vadd.f32 0.0, %v1158
      %v1160 = vpop.f32.mrb[0].mxu0
      %v1161 = vpop.f32.mrb[0].mxu0
      %v1162 = vadd.f32 0.0, %v1161
      %v1163 = vpop.f32.mrb[0].mxu0
      %1164 = vmatprep.mubr.bf16.mxu0 0
      %1165 = vmatmul.mubr.bf16.gmra.mrb[0].mxu0 %v1071
      %v1166 = vpop.f32.mrb[0].mxu0
      %v1167 = vadd.f32 0.0, %v1166
      %v1168 = vpop.f32.mrb[0].mxu0
      %v1169 = vpop.f32.mrb[0].mxu0
      %v1170 = vadd.f32 0.0, %v1169
      %v1171 = vpop.f32.mrb[0].mxu0
      %1172 = vmatprep.mubr.bf16.mxu0 0
      %1173 = vmatmul.mubr.bf16.gmra.mrb[0].mxu0 %v1074
      %v1174 = vpop.f32.mrb[0].mxu0
      %v1175 = vadd.f32 0.0, %v1174
      %v1176 = vpop.f32.mrb[0].mxu0
      %v1177 = vpop.f32.mrb[0].mxu0
      %v1178 = vadd.f32 0.0, %v1177
      %v1179 = vpop.f32.mrb[0].mxu0
      %1180 = vdwg.mxu0
      %v1181 = vmax.f32 %v916, %v1111
      %v1182 = vmax.f32 %v919, %v1114
      %v1183 = vmax.f32 %v924, %v1119
      %v1184 = vmax.f32 %v927, %v1122
      %v1185 = vmax.f32 %v932, %v1127
      %v1186 = vmax.f32 %v935, %v1130
      %v1187 = vmax.f32 %v940, %v1135
      %v1188 = vmax.f32 %v943, %v1138
      %v1189 = vmax.f32 %v948, %v1143
      %v1190 = vmax.f32 %v951, %v1146
      %v1191 = vmax.f32 %v956, %v1151
      %v1192 = vmax.f32 %v959, %v1154
      %v1193 = vmax.f32 %v964, %v1159
      %v1194 = vmax.f32 %v967, %v1162
      %v1195 = vmax.f32 %v972, %v1167
      %v1196 = vmax.f32 %v975, %v1170
      %v1197 = vmax.f32 %v980, %v1175
      %v1198 = vmax.f32 %v983, %v1178
      %v1199 = vmax.f32 %v773, %v1181
      %v1200 = vmax.f32 %v774, %v1182
      %v1201 = vmax.f32 %v775, %v1183
      %v1202 = vmax.f32 %v776, %v1184
      %v1203 = vmax.f32 %v777, %v1185
      %v1204 = vmax.f32 %v778, %v1186
      %v1205 = vmax.f32 %v779, %v1187
      %v1206 = vmax.f32 %v780, %v1188
      %v1207 = vmax.f32 %v781, %v1189
      %v1208 = vmax.f32 %v782, %v1190
      %v1209 = vmax.f32 %v783, %v1191
      %v1210 = vmax.f32 %v784, %v1192
      %v1211 = vmax.f32 %v785, %v1193
      %v1212 = vmax.f32 %v786, %v1194
      %v1213 = vmax.f32 %v787, %v1195
      %v1214 = vmax.f32 %v788, %v1196
      %v1215 = vmax.f32 %v789, %v1197
      %v1216 = vmax.f32 %v790, %v1198
      %v1217 = vld [vmem:[%s5] sm:$0x1]
      %v1219 = vlaneseq
      %v1220 = vshrl.u32 %v1219, 7
      %v1221 = vsub.s32 0, %v1220
      %v1222 = vrot.slane %v1217, %v1221
      %v1224 = vadd.f32 %v1199, %v1222
      %v1225 = vadd.f32 %v1200, %v1222
      %v1226 = vadd.f32 %v1201, %v1222
      %v1227 = vadd.f32 %v1202, %v1222
      %v1228 = vadd.f32 %v1203, %v1222
      %v1229 = vadd.f32 %v1204, %v1222
      %v1230 = vadd.f32 %v1205, %v1222
      %v1231 = vadd.f32 %v1206, %v1222
      %v1232 = vadd.f32 %v1207, %v1222
      %v1233 = vadd.f32 %v1208, %v1222
      %v1234 = vadd.f32 %v1209, %v1222
      %v1235 = vadd.f32 %v1210, %v1222
      %v1236 = vadd.f32 %v1211, %v1222
      %v1237 = vadd.f32 %v1212, %v1222
      %v1238 = vadd.f32 %v1213, %v1222
      %v1239 = vadd.f32 %v1214, %v1222
      %v1240 = vadd.f32 %v1215, %v1222
      %v1241 = vadd.f32 %v1216, %v1222
      %v1242 = vmax.f32 %v1224, 0.0
      %v1243 = vmax.f32 %v1225, 0.0
      %v1244 = vmax.f32 %v1226, 0.0
      %v1245 = vmax.f32 %v1227, 0.0
      %v1246 = vmax.f32 %v1228, 0.0
      %v1247 = vmax.f32 %v1229, 0.0
      %v1248 = vmax.f32 %v1230, 0.0
      %v1249 = vmax.f32 %v1231, 0.0
      %v1250 = vmax.f32 %v1232, 0.0
      %v1251 = vmax.f32 %v1233, 0.0
      %v1252 = vmax.f32 %v1234, 0.0
      %v1253 = vmax.f32 %v1235, 0.0
      %v1254 = vmax.f32 %v1236, 0.0
      %v1255 = vmax.f32 %v1237, 0.0
      %v1256 = vmax.f32 %v1238, 0.0
      %v1257 = vmax.f32 %v1239, 0.0
      %v1258 = vmax.f32 %v1240, 0.0
      %v1259 = vmax.f32 %v1241, 0.0
      %v1260 = vpack.c.bf16 %v1243, %v1242
      %v1261 = vpack.c.bf16 %v1245, %v1244
      %v1262 = vpack.c.bf16 %v1247, %v1246
      %v1263 = vpack.c.bf16 %v1249, %v1248
      %v1264 = vpack.c.bf16 %v1251, %v1250
      %v1265 = vpack.c.bf16 %v1253, %v1252
      %v1266 = vpack.c.bf16 %v1255, %v1254
      %v1267 = vpack.c.bf16 %v1257, %v1256
      %v1268 = vpack.c.bf16 %v1259, %v1258
      %v1278 = vunpack.c.l.b16 %v1260
      %v1279 = vunpack.c.h.b16 %v1260
      %v1280 = vunpack.c.l.b16 %v1261
      %v1281 = vunpack.c.h.b16 %v1261
      %v1282 = vunpack.c.l.b16 %v1262
      %v1283 = vunpack.c.h.b16 %v1262
      %v1284 = vunpack.c.l.b16 %v1263
      %v1285 = vunpack.c.h.b16 %v1263
      %v1286 = vunpack.c.l.b16 %v1264
      %v1287 = vunpack.c.h.b16 %v1264
      %v1288 = vunpack.c.l.b16 %v1265
      %v1289 = vunpack.c.h.b16 %v1265
      %v1290 = vunpack.c.l.b16 %v1266
      %v1291 = vunpack.c.h.b16 %v1266
      %v1292 = vunpack.c.l.b16 %v1267
      %v1293 = vunpack.c.h.b16 %v1267
      %v1294 = vunpack.c.l.b16 %v1268
      %v1295 = vunpack.c.h.b16 %v1268
      %v1296 = vpack.c.b16 %v1278, %v1278
      %v1297 = vpack.c.b16 %v1279, %v1279
      %v1298 = vpack.c.b16 %v1280, %v1280
      %v1299 = vpack.c.b16 %v1281, %v1281
      %v1300 = vpack.c.b16 %v1282, %v1282
      %v1301 = vpack.c.b16 %v1283, %v1283
      %v1302 = vpack.c.b16 %v1284, %v1284
      %v1303 = vpack.c.b16 %v1285, %v1285
      %v1304 = vpack.c.b16 %v1286, %v1286
      %v1305 = vpack.c.b16 %v1287, %v1287
      %v1306 = vpack.c.b16 %v1288, %v1288
      %v1307 = vpack.c.b16 %v1289, %v1289
      %v1308 = vpack.c.b16 %v1290, %v1290
      %v1309 = vpack.c.b16 %v1291, %v1291
      %v1310 = vpack.c.b16 %v1292, %v1292
      %v1311 = vpack.c.b16 %v1293, %v1293
      %v1312 = vpack.c.b16 %v1294, %v1294
      %v1313 = vpack.c.b16 %v1295, %v1295
      %1332 = vst [vmem:[%s353] sm:$0xf] %v1296
      %1333 = vst [vmem:[%s353 + $0x4] sm:$0xf] %v1297
      %1334 = vst [vmem:[%s353 + $0x8] sm:$0xf] %v1298
      %1335 = vst [vmem:[%s353 + $0xc] sm:$0xf] %v1299
      %1336 = vst [vmem:[%s353 + $0x10] sm:$0xf] %v1300
      %1337 = vst [vmem:[%s353 + $0x14] sm:$0xf] %v1301
      %1338 = vst [vmem:[%s353 + $0x18] sm:$0xf] %v1302
      %1339 = vst [vmem:[%s353 + $0x1c] sm:$0xf] %v1303
      %1340 = vst [vmem:[%s353 + $0x20] sm:$0xf] %v1304
      %1341 = vst [vmem:[%s353 + $0x24] sm:$0xf] %v1305
      %1342 = vst [vmem:[%s353 + $0x28] sm:$0xf] %v1306
      %1343 = vst [vmem:[%s353 + $0x2c] sm:$0xf] %v1307
      %1344 = vst [vmem:[%s353 + $0x30] sm:$0xf] %v1308
      %1345 = vst [vmem:[%s353 + $0x34] sm:$0xf] %v1309
      %1346 = vst [vmem:[%s353 + $0x38] sm:$0xf] %v1310
      %1347 = vst [vmem:[%s353 + $0x3c] sm:$0xf] %v1311
      %1348 = vst [vmem:[%s353 + $0x40] sm:$0xf] %v1312
      %1349 = vst [vmem:[%s353 + $0x44] sm:$0xf] %v1313
      %v1350 = vadd.f32 %v1242, %v1243
      %v1351 = vadd.f32 %v1350, %v1244
      %v1352 = vadd.f32 %v1351, %v1245
      %v1353 = vadd.f32 %v1352, %v1246
      %v1354 = vadd.f32 %v1353, %v1247
      %v1355 = vadd.f32 %v1354, %v1248
      %v1356 = vadd.f32 %v1355, %v1249
      %v1357 = vadd.f32 %v1356, %v1250
      %v1358 = vadd.f32 %v1357, %v1251
      %v1359 = vadd.f32 %v1358, %v1252
      %v1360 = vadd.f32 %v1359, %v1253
      %v1361 = vadd.f32 %v1360, %v1254
      %v1362 = vadd.f32 %v1361, %v1255
      %v1363 = vadd.f32 %v1362, %v1256
      %v1364 = vadd.f32 %v1363, %v1257
      %v1365 = vadd.f32 %v1364, %v1258
      %v1366 = vadd.f32 %v1365, %v1259
      %v1367 = vrot.slane %v1366, 4
      %v1368 = vadd.f32 %v1366, %v1367
      %v1369 = vrot.slane %v1368, 2
      %v1370 = vadd.f32 %v1368, %v1369
      %v1371 = vrot.slane %v1370, 1
      %v1372 = vadd.f32 %v1370, %v1371
      %1373 = vst [vmem:[%s358] sm:$0x1] %v1372
      %v1374 = vmul.f32 %v1242, %v1242
      %v1375 = vmul.f32 %v1243, %v1243
      %v1376 = vmul.f32 %v1244, %v1244
      %v1377 = vmul.f32 %v1245, %v1245
      %v1378 = vmul.f32 %v1246, %v1246
      %v1379 = vmul.f32 %v1247, %v1247
      %v1380 = vmul.f32 %v1248, %v1248
      %v1381 = vmul.f32 %v1249, %v1249
      %v1382 = vmul.f32 %v1250, %v1250
      %v1383 = vmul.f32 %v1251, %v1251
      %v1384 = vmul.f32 %v1252, %v1252
      %v1385 = vmul.f32 %v1253, %v1253
      %v1386 = vmul.f32 %v1254, %v1254
      %v1387 = vmul.f32 %v1255, %v1255
      %v1388 = vmul.f32 %v1256, %v1256
      %v1389 = vmul.f32 %v1257, %v1257
      %v1390 = vmul.f32 %v1258, %v1258
      %v1391 = vmul.f32 %v1259, %v1259
      %v1392 = vadd.f32 %v1374, %v1375
      %v1393 = vadd.f32 %v1392, %v1376
      %v1394 = vadd.f32 %v1393, %v1377
      %v1395 = vadd.f32 %v1394, %v1378
      %v1396 = vadd.f32 %v1395, %v1379
      %v1397 = vadd.f32 %v1396, %v1380
      %v1398 = vadd.f32 %v1397, %v1381
      %v1399 = vadd.f32 %v1398, %v1382
      %v1400 = vadd.f32 %v1399, %v1383
      %v1401 = vadd.f32 %v1400, %v1384
      %v1402 = vadd.f32 %v1401, %v1385
      %v1403 = vadd.f32 %v1402, %v1386
      %v1404 = vadd.f32 %v1403, %v1387
      %v1405 = vadd.f32 %v1404, %v1388
      %v1406 = vadd.f32 %v1405, %v1389
      %v1407 = vadd.f32 %v1406, %v1390
      %v1408 = vadd.f32 %v1407, %v1391
      %v1409 = vrot.slane %v1408, 4
      %v1410 = vadd.f32 %v1408, %v1409
      %v1411 = vrot.slane %v1410, 2
      %v1412 = vadd.f32 %v1410, %v1411
      %v1413 = vrot.slane %v1412, 1
      %v1414 = vadd.f32 %v1412, %v1413
      %1415 = vst [vmem:[%s358 + $0x1] sm:$0x1] %v1414
      %1416 = vst [vmem:[%s358 + $0x2] sm:$0x3f] 0.0
      %s1417 = smul.u32 18, %s19
      %p1418 = scmp.lt.s32.totalorder %s1417, 35
      %s1419 = scalar_select %p1418, %s1417, 35
      %s1420 = smul.addr %s1419, 4
      %s1421 = scalar_lea.vmem %s6, %s1420
      %p1422 = scmp.lt.s32.totalorder %s19, 1
      %s1423 = scalar_select %p1422, %s19, 1
      %s1424 = smul.addr %s1423, 8
      %s1425 = scalar_lea.vmem %s7, %s1424
      // Predicated region
      $region45: #{mnist_forward.3} parent=43 // pred_check
        %p1426 = pneg %p183
      $region46: #{mnist_forward.3} parent=43 // pred_check_branch
        %1428 = sbr.rel (%p1426) target = $region48
      $region47: #{mnist_forward.3} parent=43 // pred_region
        %s1429 = smul.u32 18, %s19
      $region48: #{mnist_forward.3} parent=43 // pred_fallthru
        _
      // Predicated region
      $region49: #{mnist_forward.3} parent=43 // pred_check
        %p1430 = pneg %p209
      $region50: #{mnist_forward.3} parent=43 // pred_check_branch
        %1432 = sbr.rel (%p1430) target = $region52
      $region51: #{mnist_forward.3} parent=43 // pred_region
        _
      $region52: #{mnist_forward.3} parent=43 // pred_fallthru
        _
    $region44: #{mnist_forward.3} parent=5 // pred_fallthru
      _
    %p1433 = scmp.le.s32.totalorder 2, %s14
    // Predicated region
    $region53: #{mnist_forward.3} parent=5 // pred_check
      %p1434 = pneg %p1433
    $region54: #{mnist_forward.3} parent=5 // pred_check_branch
      %1436 = sbr.rel (%p1434) target = $region56
    $region55: #{mnist_forward.3} parent=5 // pred_region
      %s1437 = ssub.s32 %s14, 2
      // Predicated region
      $region57: #{mnist_forward.3} parent=55 // pred_check
        %p1438 = pneg %p189
      $region58: #{mnist_forward.3} parent=55 // pred_check_branch
        %1440 = sbr.rel (%p1438) target = $region60
      $region59: #{mnist_forward.3} parent=55 // pred_region
        %s1441 = smul.u32 18, %s20
        %p1442 = scmp.lt.s32.totalorder %s1441, 35
        %s1443 = scalar_select %p1442, %s1441, 35
        %s1444 = smul.addr %s1443, 4
        %s1445 = scalar_lea.vmem %s6, %s1444
      $region60: #{mnist_forward.3} parent=55 // pred_fallthru
        _
      // Predicated region
      $region61: #{mnist_forward.3} parent=55 // pred_check
        %p1446 = pneg %p215
      $region62: #{mnist_forward.3} parent=55 // pred_check_branch
        %1448 = sbr.rel (%p1446) target = $region64
      $region63: #{mnist_forward.3} parent=55 // pred_region
        %p1449 = scmp.lt.s32.totalorder %s20, 1
        %s1450 = scalar_select %p1449, %s20, 1
        %s1451 = smul.addr %s1450, 8
        %s1452 = scalar_lea.vmem %s7, %s1451
      $region64: #{mnist_forward.3} parent=55 // pred_fallthru
        _
    $region56: #{mnist_forward.3} parent=5 // pred_fallthru
      _
  $region6: #{mnist_forward.3} parent=0 // loop_footer
    %s18 = sadd.s32 1, %s14
  $region7: #{mnist_forward.3} parent=0 // loop_footer_branch
    %13 = sbr.rel target = $region3
  $region8: #{mnist_forward.3} parent=0 // loop_exit
    _

// kernel: mnist_forward.4
$region0: #{mnist_forward.4}
  #allocation0 [shape = 'u32[]', space=smem, size = 0x4, offset = 0x4, fixed_abs, tag = 'smem constant byte address 0x4 - core index']
  #allocation1 [shape = 'u32[144,128]{1,0:T(1,128)}', space=vmem, size = 0x12000, scoped, tag = 'internal scratch']
  %s0 = inlined_call_operand.vmem [shape: bf16[32,250], index: 0, kind: input, shape index: {}]
  %s1 = inlined_call_operand.vmem [shape: bf16[32,250], index: 1, kind: input, shape index: {}]
  %s2 = inlined_call_operand.vmem [shape: bf16[32,250], index: 2, kind: input, shape index: {}]
  %s3 = inlined_call_operand.vmem [shape: bf16[32,250], index: 3, kind: input, shape index: {}]
  %s4 = inlined_call_operand.vmem [shape: bf16[250,32], index: 4, kind: input, shape index: {}]
  %s5 = inlined_call_operand.vmem [shape: f32[1,32], index: 5, kind: input, shape index: {}]
  %s6 = inlined_call_operand.vmem [shape: bf16[32,32], index: 6, kind: output, shape index: {0}]
  %s7 = inlined_call_operand.vmem [shape: f32[16,32], index: 7, kind: output, shape index: {1}]
  %8 = xla_tuple %s6, %s7
  %s9 = sld [smem:[#allocation0]]
  $region65: #{mnist_forward.4} parent=0
    _
  %s11 = ssub.s32 1, %s9
  %s12 = scalar_select 0, %s11, %s9
  loop: start=0, step=1, limit=4
  $region2: #{mnist_forward.4} parent=0 // loop_pre_header
    _
  $region3: #{mnist_forward.4} parent=0 // loop_header
    %s14 = sphi 0, %s18
    %p15 = scmp.ge.s32.totalorder %s14, 4
    %s24 = sphi 0, %s26
    %s27 = sphi 0, %s24
    %s28 = sphi 0, %s27
    %s44 = sphi 0, %s28
    %s50 = sphi 0, %s52
    %s53 = sphi 0, %s50
    %s54 = sphi 0, %s53
    %s70 = sphi 0, %s54
    %s76 = sphi 0, %s78
    %s79 = sphi 0, %s76
    %s80 = sphi 0, %s79
    %s96 = sphi 0, %s80
    %s102 = sphi 0, %s104
    %s105 = sphi 0, %s102
    %s106 = sphi 0, %s105
    %s122 = sphi 0, %s106
    %s126 = sphi 0, %s126
    %s128 = sphi 0, %s126
    %s129 = sphi 0, %s128
    %s143 = sphi 0, %s129
    %s147 = sphi 0, %s147
    %s149 = sphi 0, %s147
    %s150 = sphi 0, %s149
    %s164 = sphi 0, %s150
    %s170 = sphi 0, %s172
    %s173 = sphi 0, %s170
    %s174 = sphi 0, %s173
    %s190 = sphi 0, %s174
    %s196 = sphi 0, %s198
    %s199 = sphi 0, %s196
    %s200 = sphi 0, %s199
    %s216 = sphi 0, %s200
  $region4: #{mnist_forward.4} parent=0 // loop_header_branch
    %17 = sbr.rel (%p15) target = $region8
  $region5: #{mnist_forward.4} parent=0 // loop_body
    %s19 = ssub.s32 %s14, 1
    %s20 = ssub.s32 %s14, 2
    %s21 = sadd.s32 %s14, 1
    %s22 = ssub.s32 %s14, %s21
    %p23 = scmp.eq.s32.totalorder %s22, 0
    %s25 = sadd.s32 %s24, 1
    %s26 = scalar_select %p23, %s24, %s25
    %p29 = pneg %p23
    %p30 = scmp.eq.s32.totalorder %s14, 1
    %p31 = por %p29, %p30
    %p32 = scmp.ne.s32.totalorder %s24, %s27
    %p33 = scmp.eq.s32.totalorder %s14, 0
    %p34 = por %p32, %p33
    %p35 = scmp.ne.s32.totalorder %s24, %s27
    %p36 = scmp.eq.s32.totalorder %s19, 1
    %p37 = por %p35, %p36
    %p38 = scmp.ne.s32.totalorder %s27, %s28
    %p39 = scmp.eq.s32.totalorder %s19, 0
    %p40 = por %p38, %p39
    %p41 = scmp.ne.s32.totalorder %s27, %s28
    %p42 = scmp.eq.s32.totalorder %s20, 1
    %p43 = por %p41, %p42
    %p45 = scmp.ne.s32.totalorder %s28, %s44
    %p46 = scmp.eq.s32.totalorder %s20, 0
    %p47 = por %p45, %p46
    %s48 = ssub.s32 %s14, %s21
    %p49 = scmp.eq.s32.totalorder %s48, 0
    %s51 = sadd.s32 %s50, 1
    %s52 = scalar_select %p49, %s50, %s51
    %p55 = pneg %p49
    %p56 = scmp.eq.s32.totalorder %s14, 1
    %p57 = por %p55, %p56
    %p58 = scmp.ne.s32.totalorder %s50, %s53
    %p59 = scmp.eq.s32.totalorder %s14, 0
    %p60 = por %p58, %p59
    %p61 = scmp.ne.s32.totalorder %s50, %s53
    %p62 = scmp.eq.s32.totalorder %s19, 1
    %p63 = por %p61, %p62
    %p64 = scmp.ne.s32.totalorder %s53, %s54
    %p65 = scmp.eq.s32.totalorder %s19, 0
    %p66 = por %p64, %p65
    %p67 = scmp.ne.s32.totalorder %s53, %s54
    %p68 = scmp.eq.s32.totalorder %s20, 1
    %p69 = por %p67, %p68
    %p71 = scmp.ne.s32.totalorder %s54, %s70
    %p72 = scmp.eq.s32.totalorder %s20, 0
    %p73 = por %p71, %p72
    %s74 = ssub.s32 %s14, %s21
    %p75 = scmp.eq.s32.totalorder %s74, 0
    %s77 = sadd.s32 %s76, 1
    %s78 = scalar_select %p75, %s76, %s77
    %p81 = pneg %p75
    %p82 = scmp.eq.s32.totalorder %s14, 1
    %p83 = por %p81, %p82
    %p84 = scmp.ne.s32.totalorder %s76, %s79
    %p85 = scmp.eq.s32.totalorder %s14, 0
    %p86 = por %p84, %p85
    %p87 = scmp.ne.s32.totalorder %s76, %s79
    %p88 = scmp.eq.s32.totalorder %s19, 1
    %p89 = por %p87, %p88
    %p90 = scmp.ne.s32.totalorder %s79, %s80
    %p91 = scmp.eq.s32.totalorder %s19, 0
    %p92 = por %p90, %p91
    %p93 = scmp.ne.s32.totalorder %s79, %s80
    %p94 = scmp.eq.s32.totalorder %s20, 1
    %p95 = por %p93, %p94
    %p97 = scmp.ne.s32.totalorder %s80, %s96
    %p98 = scmp.eq.s32.totalorder %s20, 0
    %p99 = por %p97, %p98
    %s100 = ssub.s32 %s14, %s21
    %p101 = scmp.eq.s32.totalorder %s100, 0
    %s103 = sadd.s32 %s102, 1
    %s104 = scalar_select %p101, %s102, %s103
    %p107 = pneg %p101
    %p108 = scmp.eq.s32.totalorder %s14, 1
    %p109 = por %p107, %p108
    %p110 = scmp.ne.s32.totalorder %s102, %s105
    %p111 = scmp.eq.s32.totalorder %s14, 0
    %p112 = por %p110, %p111
    %p113 = scmp.ne.s32.totalorder %s102, %s105
    %p114 = scmp.eq.s32.totalorder %s19, 1
    %p115 = por %p113, %p114
    %p116 = scmp.ne.s32.totalorder %s105, %s106
    %p117 = scmp.eq.s32.totalorder %s19, 0
    %p118 = por %p116, %p117
    %p119 = scmp.ne.s32.totalorder %s105, %s106
    %p120 = scmp.eq.s32.totalorder %s20, 1
    %p121 = por %p119, %p120
    %p123 = scmp.ne.s32.totalorder %s106, %s122
    %p124 = scmp.eq.s32.totalorder %s20, 0
    %p125 = por %p123, %p124
    %s127 = sadd.s32 %s126, 1
    %p130 = scmp.eq.s32.totalorder %s14, 1
    %p131 = scmp.ne.s32.totalorder %s126, %s128
    %p132 = scmp.eq.s32.totalorder %s14, 0
    %p133 = por %p131, %p132
    %p134 = scmp.ne.s32.totalorder %s126, %s128
    %p135 = scmp.eq.s32.totalorder %s19, 1
    %p136 = por %p134, %p135
    %p137 = scmp.ne.s32.totalorder %s128, %s129
    %p138 = scmp.eq.s32.totalorder %s19, 0
    %p139 = por %p137, %p138
    %p140 = scmp.ne.s32.totalorder %s128, %s129
    %p141 = scmp.eq.s32.totalorder %s20, 1
    %p142 = por %p140, %p141
    %p144 = scmp.ne.s32.totalorder %s129, %s143
    %p145 = scmp.eq.s32.totalorder %s20, 0
    %p146 = por %p144, %p145
    %s148 = sadd.s32 %s147, 1
    %p151 = scmp.eq.s32.totalorder %s14, 1
    %p152 = scmp.ne.s32.totalorder %s147, %s149
    %p153 = scmp.eq.s32.totalorder %s14, 0
    %p154 = por %p152, %p153
    %p155 = scmp.ne.s32.totalorder %s147, %s149
    %p156 = scmp.eq.s32.totalorder %s19, 1
    %p157 = por %p155, %p156
    %p158 = scmp.ne.s32.totalorder %s149, %s150
    %p159 = scmp.eq.s32.totalorder %s19, 0
    %p160 = por %p158, %p159
    %p161 = scmp.ne.s32.totalorder %s149, %s150
    %p162 = scmp.eq.s32.totalorder %s20, 1
    %p163 = por %p161, %p162
    %p165 = scmp.ne.s32.totalorder %s150, %s164
    %p166 = scmp.eq.s32.totalorder %s20, 0
    %p167 = por %p165, %p166
    %s168 = ssub.s32 %s14, %s21
    %p169 = scmp.eq.s32.totalorder %s168, 0
    %s171 = sadd.s32 %s170, 1
    %s172 = scalar_select %p169, %s170, %s171
    %p175 = pneg %p169
    %p176 = scmp.eq.s32.totalorder %s14, 1
    %p177 = por %p175, %p176
    %p178 = scmp.ne.s32.totalorder %s170, %s173
    %p179 = scmp.eq.s32.totalorder %s14, 0
    %p180 = por %p178, %p179
    %p181 = scmp.ne.s32.totalorder %s170, %s173
    %p182 = scmp.eq.s32.totalorder %s19, 1
    %p183 = por %p181, %p182
    %p184 = scmp.ne.s32.totalorder %s173, %s174
    %p185 = scmp.eq.s32.totalorder %s19, 0
    %p186 = por %p184, %p185
    %p187 = scmp.ne.s32.totalorder %s173, %s174
    %p188 = scmp.eq.s32.totalorder %s20, 1
    %p189 = por %p187, %p188
    %p191 = scmp.ne.s32.totalorder %s174, %s190
    %p192 = scmp.eq.s32.totalorder %s20, 0
    %p193 = por %p191, %p192
    %s194 = ssub.s32 %s14, %s21
    %p195 = scmp.eq.s32.totalorder %s194, 0
    %s197 = sadd.s32 %s196, 1
    %s198 = scalar_select %p195, %s196, %s197
    %p201 = pneg %p195
    %p202 = scmp.eq.s32.totalorder %s14, 1
    %p203 = por %p201, %p202
    %p204 = scmp.ne.s32.totalorder %s196, %s199
    %p205 = scmp.eq.s32.totalorder %s14, 0
    %p206 = por %p204, %p205
    %p207 = scmp.ne.s32.totalorder %s196, %s199
    %p208 = scmp.eq.s32.totalorder %s19, 1
    %p209 = por %p207, %p208
    %p210 = scmp.ne.s32.totalorder %s199, %s200
    %p211 = scmp.eq.s32.totalorder %s19, 0
    %p212 = por %p210, %p211
    %p213 = scmp.ne.s32.totalorder %s199, %s200
    %p214 = scmp.eq.s32.totalorder %s20, 1
    %p215 = por %p213, %p214
    %p217 = scmp.ne.s32.totalorder %s200, %s216
    %p218 = scmp.eq.s32.totalorder %s20, 0
    %p219 = por %p217, %p218
    %p220 = scmp.le.s32.totalorder 1, %s14
    %p221 = scmp.lt.s32.totalorder %s14, 3
    %p222 = pnand %p220, %p221
    %p223 = pneg %p222
    // Predicated region
    $region9: #{mnist_forward.4} parent=5 // pred_check
      _
    $region10: #{mnist_forward.4} parent=5 // pred_check_branch
      %225 = sbr.rel (%p222) target = $region12
    $region11: #{mnist_forward.4} parent=5 // pred_region
      %s226 = ssub.s32 %s14, 1
      // Predicated region
      $region13: #{mnist_forward.4} parent=11 // pred_check
        %p227 = pneg %p139
      $region14: #{mnist_forward.4} parent=11 // pred_check_branch
        %229 = sbr.rel (%p227) target = $region16
      $region15: #{mnist_forward.4} parent=11 // pred_region
        _
      $region16: #{mnist_forward.4} parent=11 // pred_fallthru
        _
      // Predicated region
      $region17: #{mnist_forward.4} parent=11 // pred_check
        %p230 = pneg %p160
      $region18: #{mnist_forward.4} parent=11 // pred_check_branch
        %232 = sbr.rel (%p230) target = $region20
      $region19: #{mnist_forward.4} parent=11 // pred_region
        _
      $region20: #{mnist_forward.4} parent=11 // pred_fallthru
        _
    $region12: #{mnist_forward.4} parent=5 // pred_fallthru
      _
    %p233 = scmp.lt.s32.totalorder %s14, 2
    // Predicated region
    $region21: #{mnist_forward.4} parent=5 // pred_check
      %p234 = pneg %p233
    $region22: #{mnist_forward.4} parent=5 // pred_check_branch
      %236 = sbr.rel (%p234) target = $region24
    $region23: #{mnist_forward.4} parent=5 // pred_region
      // Predicated region
      $region25: #{mnist_forward.4} parent=23 // pred_check
        %p237 = pneg %p34
      $region26: #{mnist_forward.4} parent=23 // pred_check_branch
        %239 = sbr.rel (%p237) target = $region28
      $region27: #{mnist_forward.4} parent=23 // pred_region
        %s240 = smul.u32 2, %s14
        %p241 = scmp.lt.s32.totalorder %s240, 3
        %s242 = scalar_select %p241, %s240, 3
        %s243 = smul.addr %s242, 2
        %s244 = smul.addr %s243, 4
        %s245 = scalar_lea.vmem %s0, %s244
        %s246 = smul.u32 2, %s14
      $region28: #{mnist_forward.4} parent=23 // pred_fallthru
        _
      // Predicated region
      $region29: #{mnist_forward.4} parent=23 // pred_check
        %p247 = pneg %p60
      $region30: #{mnist_forward.4} parent=23 // pred_check_branch
        %249 = sbr.rel (%p247) target = $region32
      $region31: #{mnist_forward.4} parent=23 // pred_region
        %s250 = smul.u32 2, %s14
        %p251 = scmp.lt.s32.totalorder %s250, 3
        %s252 = scalar_select %p251, %s250, 3
        %s253 = smul.addr %s252, 2
        %s254 = smul.addr %s253, 4
        %s255 = scalar_lea.vmem %s1, %s254
        %s256 = smul.u32 2, %s14
      $region32: #{mnist_forward.4} parent=23 // pred_fallthru
        _
      // Predicated region
      $region33: #{mnist_forward.4} parent=23 // pred_check
        %p257 = pneg %p86
      $region34: #{mnist_forward.4} parent=23 // pred_check_branch
        %259 = sbr.rel (%p257) target = $region36
      $region35: #{mnist_forward.4} parent=23 // pred_region
        %s260 = smul.u32 2, %s14
        %p261 = scmp.lt.s32.totalorder %s260, 3
        %s262 = scalar_select %p261, %s260, 3
        %s263 = smul.addr %s262, 2
        %s264 = smul.addr %s263, 4
        %s265 = scalar_lea.vmem %s2, %s264
        %s266 = smul.u32 2, %s14
      $region36: #{mnist_forward.4} parent=23 // pred_fallthru
        _
      // Predicated region
      $region37: #{mnist_forward.4} parent=23 // pred_check
        %p267 = pneg %p112
      $region38: #{mnist_forward.4} parent=23 // pred_check_branch
        %269 = sbr.rel (%p267) target = $region40
      $region39: #{mnist_forward.4} parent=23 // pred_region
        %s270 = smul.u32 2, %s14
        %p271 = scmp.lt.s32.totalorder %s270, 3
        %s272 = scalar_select %p271, %s270, 3
        %s273 = smul.addr %s272, 2
        %s274 = smul.addr %s273, 4
        %s275 = scalar_lea.vmem %s3, %s274
        %s276 = smul.u32 2, %s14
      $region40: #{mnist_forward.4} parent=23 // pred_fallthru
        _
    $region24: #{mnist_forward.4} parent=5 // pred_fallthru
      _
    %p277 = scmp.le.s32.totalorder 1, %s14
    %p278 = scmp.lt.s32.totalorder %s14, 3
    %p279 = pnand %p277, %p278
    %p280 = pneg %p279
    // Predicated region
    $region41: #{mnist_forward.4} parent=5 // pred_check
      _
    $region42: #{mnist_forward.4} parent=5 // pred_check_branch
      %282 = sbr.rel (%p279) target = $region44
    $region43: #{mnist_forward.4} parent=5 // pred_region
      %s283 = ssub.s32 %s14, 1
      %s284 = smul.u32 2, %s19
      %p285 = scmp.lt.s32.totalorder %s284, 3
      %s286 = scalar_select %p285, %s284, 3
      %s287 = smul.addr %s286, 2
      %s288 = smul.addr %s287, 4
      %s289 = scalar_lea.vmem %s0, %s288
      %p290 = pneg %p40
      %p291 = pneg %p37
      %s292 = smul.u32 2, %s19
      %p293 = scmp.lt.s32.totalorder %s292, 3
      %s294 = scalar_select %p293, %s292, 3
      %s295 = smul.addr %s294, 2
      %s296 = smul.addr %s295, 4
      %s297 = scalar_lea.vmem %s1, %s296
      %p298 = pneg %p66
      %p299 = pneg %p63
      %s300 = smul.u32 2, %s19
      %p301 = scmp.lt.s32.totalorder %s300, 3
      %s302 = scalar_select %p301, %s300, 3
      %s303 = smul.addr %s302, 2
      %s304 = smul.addr %s303, 4
      %s305 = scalar_lea.vmem %s2, %s304
      %p306 = pneg %p92
      %p307 = pneg %p89
      %s308 = smul.u32 2, %s19
      %p309 = scmp.lt.s32.totalorder %s308, 3
      %s310 = scalar_select %p309, %s308, 3
      %s311 = smul.addr %s310, 2
      %s312 = smul.addr %s311, 4
      %s313 = scalar_lea.vmem %s3, %s312
      %p314 = pneg %p118
      %p315 = pneg %p115
      %p316 = pneg %p139
      %p317 = pneg %p136
      %p318 = pneg %p160
      %p319 = pneg %p157
      %p320 = pneg %p186
      %p321 = pneg %p183
      %s322 = smul.u32 2, %s19
      %p323 = scmp.lt.s32.totalorder %s322, 3
      %s324 = scalar_select %p323, %s322, 3
      %s325 = smul.addr %s324, 4
      %s326 = scalar_lea.vmem %s6, %s325
      %p327 = pneg %p212
      %p328 = pneg %p209
      %p329 = scmp.lt.s32.totalorder %s19, 1
      %s330 = scalar_select %p329, %s19, 1
      %s331 = smul.addr %s330, 8
      %s332 = scalar_lea.vmem %s7, %s331
      %s333 = smul.u32 2, %s19
      %p334 = scmp.lt.s32.totalorder %s333, 3
      %s335 = scalar_select %p334, %s333, 3
      %s336 = smul.addr %s335, 2
      %s337 = smul.addr %s336, 4
      %s338 = scalar_lea.vmem %s0, %s337
      %s339 = smul.u32 2, %s19
      %s340 = smul.u32 2, %s19
      %p341 = scmp.lt.s32.totalorder %s340, 3
      %s342 = scalar_select %p341, %s340, 3
      %s343 = smul.addr %s342, 2
      %s344 = smul.addr %s343, 4
      %s345 = scalar_lea.vmem %s1, %s344
      %s346 = smul.u32 2, %s19
      %s347 = smul.u32 2, %s19
      %p348 = scmp.lt.s32.totalorder %s347, 3
      %s349 = scalar_select %p348, %s347, 3
      %s350 = smul.addr %s349, 2
      %s351 = smul.addr %s350, 4
      %s352 = scalar_lea.vmem %s2, %s351
      %s353 = smul.u32 2, %s19
      %s354 = smul.u32 2, %s19
      %p355 = scmp.lt.s32.totalorder %s354, 3
      %s356 = scalar_select %p355, %s354, 3
      %s357 = smul.addr %s356, 2
      %s358 = smul.addr %s357, 4
      %s359 = scalar_lea.vmem %s3, %s358
      %s360 = smul.u32 2, %s19
      %s361 = smul.u32 2, %s19
      %p362 = scmp.lt.s32.totalorder %s361, 3
      %s363 = scalar_select %p362, %s361, 3
      %s364 = smul.addr %s363, 4
      %s365 = scalar_lea.vmem %s6, %s364
      %s366 = smul.u32 2, %s19
      %p367 = scmp.lt.s32.totalorder %s19, 1
      %s368 = scalar_select %p367, %s19, 1
      %s369 = smul.addr %s368, 8
      %s370 = scalar_lea.vmem %s7, %s369
      %v372 = vld [vmem:[%s4] sm:$0xf]
      %v373 = vld [vmem:[%s4 + $0x4] sm:$0xf]
      %v374 = vld [vmem:[%s4 + $0x8] sm:$0xf]
      %v375 = vld [vmem:[%s4 + $0xc] sm:$0xf]
      %v376 = vld [vmem:[%s4 + $0x10] sm:$0xf]
      %v377 = vld [vmem:[%s4 + $0x14] sm:$0xf]
      %v378 = vld [vmem:[%s4 + $0x18] sm:$0xf]
      %v379 = vld [vmem:[%s4 + $0x1c] sm:$0xf]
      %v380 = vld [vmem:[%s4 + $0x20] sm:$0xf]
      %v381 = vld [vmem:[%s4 + $0x24] sm:$0xf]
      %v382 = vld [vmem:[%s4 + $0x28] sm:$0xf]
      %v383 = vld [vmem:[%s4 + $0x2c] sm:$0xf]
      %v384 = vld [vmem:[%s4 + $0x30] sm:$0xf]
      %v385 = vld [vmem:[%s4 + $0x34] sm:$0xf]
      %v386 = vld [vmem:[%s4 + $0x38] sm:$0xf]
      %v387 = vld [vmem:[%s4 + $0x3c] sm:$0xf]
      %v388 = vld [vmem:[%s4 + $0x40] sm:$0xf]
      %v389 = vld [vmem:[%s4 + $0x44] sm:$0xf]
      %v390 = vld [vmem:[%s4 + $0x48] sm:$0xf]
      %v391 = vld [vmem:[%s4 + $0x4c] sm:$0xf]
      %v392 = vld [vmem:[%s4 + $0x50] sm:$0xf]
      %v393 = vld [vmem:[%s4 + $0x54] sm:$0xf]
      %v394 = vld [vmem:[%s4 + $0x58] sm:$0xf]
      %v395 = vld [vmem:[%s4 + $0x5c] sm:$0xf]
      %v396 = vld [vmem:[%s4 + $0x60] sm:$0xf]
      %v397 = vld [vmem:[%s4 + $0x64] sm:$0xf]
      %v398 = vld [vmem:[%s4 + $0x68] sm:$0xf]
      %v399 = vld [vmem:[%s4 + $0x6c] sm:$0xf]
      %v400 = vld [vmem:[%s4 + $0x70] sm:$0xf]
      %v401 = vld [vmem:[%s4 + $0x74] sm:$0xf]
      %v402 = vld [vmem:[%s4 + $0x78] sm:$0xf]
      %v403 = vld [vmem:[%s4 + $0x7c] sm:$0x1]
      %v404 = vld [vmem:[%s338] sm:$0xff]
      %v405 = vld [vmem:[%s338 + $0x8] sm:$0xff]
      %v408 = vunpack.c.l.b16 %v404
      %v409 = vunpack.c.h.b16 %v404
      %v410 = vunpack.c.l.b16 %v405
      %v411 = vunpack.c.h.b16 %v405
      %v412 = vpack.c.b16 %v410, %v408
      %v413 = vpack.c.b16 %v411, %v409
      %v447 = vunpack.c.l.b16 %v372
      %v448 = vunpack.c.l.b16 %v373
      %v449 = vunpack.c.l.b16 %v374
      %v450 = vunpack.c.l.b16 %v375
      %v451 = vunpack.c.l.b16 %v376
      %v452 = vunpack.c.l.b16 %v377
      %v453 = vunpack.c.l.b16 %v378
      %v454 = vunpack.c.l.b16 %v379
      %v455 = vunpack.c.l.b16 %v380
      %v456 = vunpack.c.l.b16 %v381
      %v457 = vunpack.c.l.b16 %v382
      %v458 = vunpack.c.l.b16 %v383
      %v459 = vunpack.c.l.b16 %v384
      %v460 = vunpack.c.l.b16 %v385
      %v461 = vunpack.c.l.b16 %v386
      %v462 = vunpack.c.l.b16 %v387
      %v463 = vunpack.c.l.b16 %v388
      %v464 = vunpack.c.l.b16 %v389
      %v465 = vunpack.c.l.b16 %v390
      %v466 = vunpack.c.l.b16 %v391
      %v467 = vunpack.c.l.b16 %v392
      %v468 = vunpack.c.l.b16 %v393
      %v469 = vunpack.c.l.b16 %v394
      %v470 = vunpack.c.l.b16 %v395
      %v471 = vunpack.c.l.b16 %v396
      %v472 = vunpack.c.l.b16 %v397
      %v473 = vunpack.c.l.b16 %v398
      %v474 = vunpack.c.l.b16 %v399
      %v475 = vunpack.c.l.b16 %v400
      %v476 = vunpack.c.l.b16 %v401
      %v477 = vunpack.c.l.b16 %v402
      %v478 = vunpack.c.l.b16 %v403
      %v479 = vpack.c.b16 %v448, %v447
      %v480 = vpack.c.b16 %v450, %v449
      %v481 = vpack.c.b16 %v452, %v451
      %v482 = vpack.c.b16 %v454, %v453
      %v483 = vpack.c.b16 %v456, %v455
      %v484 = vpack.c.b16 %v458, %v457
      %v485 = vpack.c.b16 %v460, %v459
      %v486 = vpack.c.b16 %v462, %v461
      %v487 = vpack.c.b16 %v464, %v463
      %v488 = vpack.c.b16 %v466, %v465
      %v489 = vpack.c.b16 %v468, %v467
      %v490 = vpack.c.b16 %v470, %v469
      %v491 = vpack.c.b16 %v472, %v471
      %v492 = vpack.c.b16 %v474, %v473
      %v493 = vpack.c.b16 %v476, %v475
      %v494 = vpack.c.b16 %v478, %v477
      %vm510 = vcmask 998400
      %v512 = vsel %vm510, %v413, 0
      %vm514 = vcmask 1044480
      %v516 = vsel %vm514, %v494, 0
      %518 = vmatprep.subr.bf16.mxu0 0
      %519 = vmatpush1.bf16.msra.mxu0 %v479
      %520 = vmatprep.subr.bf16.mxu0 0
      %521 = vmatpush1.bf16.msra.mxu0 %v480
      %522 = vmatprep.subr.bf16.mxu0 0
      %523 = vmatpush1.bf16.msra.mxu0 %v481
      %524 = vmatprep.subr.bf16.mxu0 0
      %525 = vmatpush1.bf16.msra.mxu0 %v482
      %526 = vmatprep.subr.bf16.mxu0 0
      %527 = vmatpush1.bf16.msra.mxu0 %v483
      %528 = vmatprep.subr.bf16.mxu0 0
      %529 = vmatpush1.bf16.msra.mxu0 %v484
      %530 = vmatprep.subr.bf16.mxu0 0
      %531 = vmatpush1.bf16.msra.mxu0 %v485
      %532 = vmatprep.subr.bf16.mxu0 0
      %533 = vmatpush1.bf16.msra.mxu0 %v486
      %534 = vmatprep.subr.bf16.mxu0 0
      %535 = vmatpush1.bf16.msra.mxu0 %v487
      %536 = vmatprep.subr.bf16.mxu0 0
      %537 = vmatpush1.bf16.msra.mxu0 %v488
      %538 = vmatprep.subr.bf16.mxu0 0
      %539 = vmatpush1.bf16.msra.mxu0 %v489
      %540 = vmatprep.subr.bf16.mxu0 0
      %541 = vmatpush1.bf16.msra.mxu0 %v490
      %542 = vmatprep.subr.bf16.mxu0 0
      %543 = vmatpush1.bf16.msra.mxu0 %v491
      %544 = vmatprep.subr.bf16.mxu0 0
      %545 = vmatpush1.bf16.msra.mxu0 %v492
      %546 = vmatprep.subr.bf16.mxu0 0
      %547 = vmatpush1.bf16.msra.mxu0 %v493
      %548 = vmatprep.subr.bf16.mxu0 0
      %549 = vmatpush1.bf16.msra.mxu0 %v516
      %550 = vmatprep.mubr.bf16.mxu0 %v512
      %551 = vmatmul.mubr.bf16.gmra.mrb[0].mxu0 %v412
      %v552 = vpop.f32.mrb[0].mxu0
      %v553 = vadd.f32 0.0, %v552
      %v554 = vpop.f32.mrb[0].mxu0
      %v555 = vpop.f32.mrb[0].mxu0
      %v556 = vadd.f32 0.0, %v555
      %v557 = vpop.f32.mrb[0].mxu0
      %558 = vdwg.mxu0
      %v559 = vld [vmem:[%s345] sm:$0xff]
      %v560 = vld [vmem:[%s345 + $0x8] sm:$0xff]
      %v563 = vunpack.c.l.b16 %v559
      %v564 = vunpack.c.h.b16 %v559
      %v565 = vunpack.c.l.b16 %v560
      %v566 = vunpack.c.h.b16 %v560
      %v567 = vpack.c.b16 %v565, %v563
      %v568 = vpack.c.b16 %v566, %v564
      %v571 = vsel %vm510, %v568, 0
      %573 = vmatprep.subr.bf16.mxu0 0
      %574 = vmatpush1.bf16.msra.mxu0 %v479
      %575 = vmatprep.subr.bf16.mxu0 0
      %576 = vmatpush1.bf16.msra.mxu0 %v480
      %577 = vmatprep.subr.bf16.mxu0 0
      %578 = vmatpush1.bf16.msra.mxu0 %v481
      %579 = vmatprep.subr.bf16.mxu0 0
      %580 = vmatpush1.bf16.msra.mxu0 %v482
      %581 = vmatprep.subr.bf16.mxu0 0
      %582 = vmatpush1.bf16.msra.mxu0 %v483
      %583 = vmatprep.subr.bf16.mxu0 0
      %584 = vmatpush1.bf16.msra.mxu0 %v484
      %585 = vmatprep.subr.bf16.mxu0 0
      %586 = vmatpush1.bf16.msra.mxu0 %v485
      %587 = vmatprep.subr.bf16.mxu0 0
      %588 = vmatpush1.bf16.msra.mxu0 %v486
      %589 = vmatprep.subr.bf16.mxu0 0
      %590 = vmatpush1.bf16.msra.mxu0 %v487
      %591 = vmatprep.subr.bf16.mxu0 0
      %592 = vmatpush1.bf16.msra.mxu0 %v488
      %593 = vmatprep.subr.bf16.mxu0 0
      %594 = vmatpush1.bf16.msra.mxu0 %v489
      %595 = vmatprep.subr.bf16.mxu0 0
      %596 = vmatpush1.bf16.msra.mxu0 %v490
      %597 = vmatprep.subr.bf16.mxu0 0
      %598 = vmatpush1.bf16.msra.mxu0 %v491
      %599 = vmatprep.subr.bf16.mxu0 0
      %600 = vmatpush1.bf16.msra.mxu0 %v492
      %601 = vmatprep.subr.bf16.mxu0 0
      %602 = vmatpush1.bf16.msra.mxu0 %v493
      %603 = vmatprep.subr.bf16.mxu0 0
      %604 = vmatpush1.bf16.msra.mxu0 %v516
      %605 = vmatprep.mubr.bf16.mxu0 %v571
      %606 = vmatmul.mubr.bf16.gmra.mrb[0].mxu0 %v567
      %v607 = vpop.f32.mrb[0].mxu0
      %v608 = vadd.f32 0.0, %v607
      %v609 = vpop.f32.mrb[0].mxu0
      %v610 = vpop.f32.mrb[0].mxu0
      %v611 = vadd.f32 0.0, %v610
      %v612 = vpop.f32.mrb[0].mxu0
      %613 = vdwg.mxu0
      %v614 = vmax.f32 %v553, %v608
      %v615 = vmax.f32 %v556, %v611
      %v616 = vld [vmem:[%s352] sm:$0xff]
      %v617 = vld [vmem:[%s352 + $0x8] sm:$0xff]
      %v620 = vunpack.c.l.b16 %v616
      %v621 = vunpack.c.h.b16 %v616
      %v622 = vunpack.c.l.b16 %v617
      %v623 = vunpack.c.h.b16 %v617
      %v624 = vpack.c.b16 %v622, %v620
      %v625 = vpack.c.b16 %v623, %v621
      %v628 = vsel %vm510, %v625, 0
      %630 = vmatprep.subr.bf16.mxu0 0
      %631 = vmatpush1.bf16.msra.mxu0 %v479
      %632 = vmatprep.subr.bf16.mxu0 0
      %633 = vmatpush1.bf16.msra.mxu0 %v480
      %634 = vmatprep.subr.bf16.mxu0 0
      %635 = vmatpush1.bf16.msra.mxu0 %v481
      %636 = vmatprep.subr.bf16.mxu0 0
      %637 = vmatpush1.bf16.msra.mxu0 %v482
      %638 = vmatprep.subr.bf16.mxu0 0
      %639 = vmatpush1.bf16.msra.mxu0 %v483
      %640 = vmatprep.subr.bf16.mxu0 0
      %641 = vmatpush1.bf16.msra.mxu0 %v484
      %642 = vmatprep.subr.bf16.mxu0 0
      %643 = vmatpush1.bf16.msra.mxu0 %v485
      %644 = vmatprep.subr.bf16.mxu0 0
      %645 = vmatpush1.bf16.msra.mxu0 %v486
      %646 = vmatprep.subr.bf16.mxu0 0
      %647 = vmatpush1.bf16.msra.mxu0 %v487
      %648 = vmatprep.subr.bf16.mxu0 0
      %649 = vmatpush1.bf16.msra.mxu0 %v488
      %650 = vmatprep.subr.bf16.mxu0 0
      %651 = vmatpush1.bf16.msra.mxu0 %v489
      %652 = vmatprep.subr.bf16.mxu0 0
      %653 = vmatpush1.bf16.msra.mxu0 %v490
      %654 = vmatprep.subr.bf16.mxu0 0
      %655 = vmatpush1.bf16.msra.mxu0 %v491
      %656 = vmatprep.subr.bf16.mxu0 0
      %657 = vmatpush1.bf16.msra.mxu0 %v492
      %658 = vmatprep.subr.bf16.mxu0 0
      %659 = vmatpush1.bf16.msra.mxu0 %v493
      %660 = vmatprep.subr.bf16.mxu0 0
      %661 = vmatpush1.bf16.msra.mxu0 %v516
      %662 = vmatprep.mubr.bf16.mxu0 %v628
      %663 = vmatmul.mubr.bf16.gmra.mrb[0].mxu0 %v624
      %v664 = vpop.f32.mrb[0].mxu0
      %v665 = vadd.f32 0.0, %v664
      %v666 = vpop.f32.mrb[0].mxu0
      %v667 = vpop.f32.mrb[0].mxu0
      %v668 = vadd.f32 0.0, %v667
      %v669 = vpop.f32.mrb[0].mxu0
      %670 = vdwg.mxu0
      %v671 = vld [vmem:[%s359] sm:$0xff]
      %v672 = vld [vmem:[%s359 + $0x8] sm:$0xff]
      %v675 = vunpack.c.l.b16 %v671
      %v676 = vunpack.c.h.b16 %v671
      %v677 = vunpack.c.l.b16 %v672
      %v678 = vunpack.c.h.b16 %v672
      %v679 = vpack.c.b16 %v677, %v675
      %v680 = vpack.c.b16 %v678, %v676
      %v683 = vsel %vm510, %v680, 0
      %685 = vmatprep.subr.bf16.mxu0 0
      %686 = vmatpush1.bf16.msra.mxu0 %v479
      %687 = vmatprep.subr.bf16.mxu0 0
      %688 = vmatpush1.bf16.msra.mxu0 %v480
      %689 = vmatprep.subr.bf16.mxu0 0
      %690 = vmatpush1.bf16.msra.mxu0 %v481
      %691 = vmatprep.subr.bf16.mxu0 0
      %692 = vmatpush1.bf16.msra.mxu0 %v482
      %693 = vmatprep.subr.bf16.mxu0 0
      %694 = vmatpush1.bf16.msra.mxu0 %v483
      %695 = vmatprep.subr.bf16.mxu0 0
      %696 = vmatpush1.bf16.msra.mxu0 %v484
      %697 = vmatprep.subr.bf16.mxu0 0
      %698 = vmatpush1.bf16.msra.mxu0 %v485
      %699 = vmatprep.subr.bf16.mxu0 0
      %700 = vmatpush1.bf16.msra.mxu0 %v486
      %701 = vmatprep.subr.bf16.mxu0 0
      %702 = vmatpush1.bf16.msra.mxu0 %v487
      %703 = vmatprep.subr.bf16.mxu0 0
      %704 = vmatpush1.bf16.msra.mxu0 %v488
      %705 = vmatprep.subr.bf16.mxu0 0
      %706 = vmatpush1.bf16.msra.mxu0 %v489
      %707 = vmatprep.subr.bf16.mxu0 0
      %708 = vmatpush1.bf16.msra.mxu0 %v490
      %709 = vmatprep.subr.bf16.mxu0 0
      %710 = vmatpush1.bf16.msra.mxu0 %v491
      %711 = vmatprep.subr.bf16.mxu0 0
      %712 = vmatpush1.bf16.msra.mxu0 %v492
      %713 = vmatprep.subr.bf16.mxu0 0
      %714 = vmatpush1.bf16.msra.mxu0 %v493
      %715 = vmatprep.subr.bf16.mxu0 0
      %716 = vmatpush1.bf16.msra.mxu0 %v516
      %717 = vmatprep.mubr.bf16.mxu0 %v683
      %718 = vmatmul.mubr.bf16.gmra.mrb[0].mxu0 %v679
      %v719 = vpop.f32.mrb[0].mxu0
      %v720 = vadd.f32 0.0, %v719
      %v721 = vpop.f32.mrb[0].mxu0
      %v722 = vpop.f32.mrb[0].mxu0
      %v723 = vadd.f32 0.0, %v722
      %v724 = vpop.f32.mrb[0].mxu0
      %725 = vdwg.mxu0
      %v726 = vmax.f32 %v665, %v720
      %v727 = vmax.f32 %v668, %v723
      %v728 = vmax.f32 %v614, %v726
      %v729 = vmax.f32 %v615, %v727
      %v730 = vld [vmem:[%s5] sm:$0x1]
      %v732 = vlaneseq
      %v733 = vshrl.u32 %v732, 7
      %v734 = vsub.s32 0, %v733
      %v735 = vrot.slane %v730, %v734
      %v737 = vadd.f32 %v728, %v735
      %v738 = vadd.f32 %v729, %v735
      %v739 = vmax.f32 %v737, 0.0
      %v740 = vmax.f32 %v738, 0.0
      %v741 = vpack.c.bf16 %v740, %v739
      %v743 = vunpack.c.l.b16 %v741
      %v744 = vunpack.c.h.b16 %v741
      %v745 = vpack.c.b16 %v743, %v743
      %v746 = vpack.c.b16 %v744, %v744
      %vm749 = vcmask 257024
      %750 = vst.msk [vmem:[%s365] sm:$0xf] %vm749, %v745
      %751 = vst.msk [vmem:[%s365 + $0x4] sm:$0xf] %vm749, %v746
      %vm752 = vcmask 261120
      %v753 = vsel %vm752, %v739, 0.0
      %v754 = vsel %vm752, %v740, 0.0
      %v755 = vadd.f32 %v753, %v754
      %v756 = vrot.slane %v755, 4
      %v757 = vadd.f32 %v755, %v756
      %v758 = vrot.slane %v757, 2
      %v759 = vadd.f32 %v757, %v758
      %v760 = vrot.slane %v759, 1
      %v761 = vadd.f32 %v759, %v760
      %vm762 = vcmask 253952
      %763 = vst.msk [vmem:[%s370] sm:$0x1] %vm762, %v761
      %v764 = vmul.f32 %v739, %v739
      %v765 = vmul.f32 %v740, %v740
      %v766 = vsel %vm752, %v764, 0.0
      %v767 = vsel %vm752, %v765, 0.0
      %v768 = vadd.f32 %v766, %v767
      %v769 = vrot.slane %v768, 4
      %v770 = vadd.f32 %v768, %v769
      %v771 = vrot.slane %v770, 2
      %v772 = vadd.f32 %v770, %v771
      %v773 = vrot.slane %v772, 1
      %v774 = vadd.f32 %v772, %v773
      %775 = vst.msk [vmem:[%s370 + $0x1] sm:$0x1] %vm762, %v774
      %vm776 = vcmask 259072
      %777 = vst.msk [vmem:[%s370 + $0x2] sm:$0x3f] %vm776, 0.0
      %s778 = smul.u32 2, %s19
      %p779 = scmp.lt.s32.totalorder %s778, 3
      %s780 = scalar_select %p779, %s778, 3
      %s781 = smul.addr %s780, 4
      %s782 = scalar_lea.vmem %s6, %s781
      %p783 = scmp.lt.s32.totalorder %s19, 1
      %s784 = scalar_select %p783, %s19, 1
      %s785 = smul.addr %s784, 8
      %s786 = scalar_lea.vmem %s7, %s785
      // Predicated region
      $region45: #{mnist_forward.4} parent=43 // pred_check
        %p787 = pneg %p183
      $region46: #{mnist_forward.4} parent=43 // pred_check_branch
        %789 = sbr.rel (%p787) target = $region48
      $region47: #{mnist_forward.4} parent=43 // pred_region
        %s790 = smul.u32 2, %s19
      $region48: #{mnist_forward.4} parent=43 // pred_fallthru
        _
      // Predicated region
      $region49: #{mnist_forward.4} parent=43 // pred_check
        %p791 = pneg %p209
      $region50: #{mnist_forward.4} parent=43 // pred_check_branch
        %793 = sbr.rel (%p791) target = $region52
      $region51: #{mnist_forward.4} parent=43 // pred_region
        _
      $region52: #{mnist_forward.4} parent=43 // pred_fallthru
        _
    $region44: #{mnist_forward.4} parent=5 // pred_fallthru
      _
    %p794 = scmp.le.s32.totalorder 2, %s14
    // Predicated region
    $region53: #{mnist_forward.4} parent=5 // pred_check
      %p795 = pneg %p794
    $region54: #{mnist_forward.4} parent=5 // pred_check_branch
      %797 = sbr.rel (%p795) target = $region56
    $region55: #{mnist_forward.4} parent=5 // pred_region
      %s798 = ssub.s32 %s14, 2
      // Predicated region
      $region57: #{mnist_forward.4} parent=55 // pred_check
        %p799 = pneg %p189
      $region58: #{mnist_forward.4} parent=55 // pred_check_branch
        %801 = sbr.rel (%p799) target = $region60
      $region59: #{mnist_forward.4} parent=55 // pred_region
        %s802 = smul.u32 2, %s20
        %p803 = scmp.lt.s32.totalorder %s802, 3
        %s804 = scalar_select %p803, %s802, 3
        %s805 = smul.addr %s804, 4
        %s806 = scalar_lea.vmem %s6, %s805
      $region60: #{mnist_forward.4} parent=55 // pred_fallthru
        _
      // Predicated region
      $region61: #{mnist_forward.4} parent=55 // pred_check
        %p807 = pneg %p215
      $region62: #{mnist_forward.4} parent=55 // pred_check_branch
        %809 = sbr.rel (%p807) target = $region64
      $region63: #{mnist_forward.4} parent=55 // pred_region
        %p810 = scmp.lt.s32.totalorder %s20, 1
        %s811 = scalar_select %p810, %s20, 1
        %s812 = smul.addr %s811, 8
        %s813 = scalar_lea.vmem %s7, %s812
      $region64: #{mnist_forward.4} parent=55 // pred_fallthru
        _
    $region56: #{mnist_forward.4} parent=5 // pred_fallthru
      _
  $region6: #{mnist_forward.4} parent=0 // loop_footer
    %s18 = sadd.s32 1, %s14
  $region7: #{mnist_forward.4} parent=0 // loop_footer_branch
    %13 = sbr.rel target = $region3
  $region8: #{mnist_forward.4} parent=0 // loop_exit
    _

// kernel: mnist_forward.5
$region0: #{mnist_forward.5}
  #allocation0 [shape = 'u32[]', space=smem, size = 0x4, offset = 0x4, fixed_abs, tag = 'smem constant byte address 0x4 - core index']
  #allocation1 [shape = 'u32[144,128]{1,0:T(1,128)}', space=vmem, size = 0x12000, scoped, tag = 'internal scratch']
  %s0 = inlined_call_operand.vmem [shape: bf16[2,512], index: 0, kind: input, shape index: {}]
  %s1 = inlined_call_operand.vmem [shape: bf16[512,128], index: 1, kind: input, shape index: {}]
  %s2 = inlined_call_operand.vmem [shape: f32[1,128], index: 2, kind: input, shape index: {}]
  %s3 = inlined_call_operand.vmem [shape: bf16[128,128], index: 3, kind: input, shape index: {}]
  %s4 = inlined_call_operand.vmem [shape: f32[1,128], index: 4, kind: input, shape index: {}]
  %s5 = inlined_call_operand.hbm [shape: f32[2,128], index: 5, kind: output, shape index: {}]
  %s6 = sld [smem:[#allocation0]]
  $region30: #{mnist_forward.5} parent=0
    _
  %s8 = ssub.s32 1, %s6
  %s9 = scalar_select 0, %s8, %s6
  $region1: #{mnist_forward.5} parent=0
    #allocation2 [shape = 'u8[1024]{0}', space=vmem, size = 0x400, scoped, tag = 'output window, operand 0, single buffered']
    #allocation3 [shape = 's32[1]{0}', space=sflag, size = 0x4, scoped, tag = 'scoped memory for mnist_forward.5']
    %10 = vsyncpa [#allocation3], 0
    // Predicated region
    $region2: #{mnist_forward.5} parent=1 // pred_check
      _
    $region3: #{mnist_forward.5} parent=1 // pred_check_branch
      %12 = sbr.rel (0) target = $region5
    $region4: #{mnist_forward.5} parent=1 // pred_region
      _
    $region5: #{mnist_forward.5} parent=1 // pred_fallthru
      _
    // Predicated region
    $region6: #{mnist_forward.5} parent=1 // pred_check
      _
    $region7: #{mnist_forward.5} parent=1 // pred_check_branch
      %14 = sbr.rel (0) target = $region9
    $region8: #{mnist_forward.5} parent=1 // pred_region
      _
    $region9: #{mnist_forward.5} parent=1 // pred_fallthru
      _
    // Predicated region
    $region10: #{mnist_forward.5} parent=1 // pred_check
      _
    $region11: #{mnist_forward.5} parent=1 // pred_check_branch
      %16 = sbr.rel (0) target = $region13
    $region12: #{mnist_forward.5} parent=1 // pred_region
      _
    $region13: #{mnist_forward.5} parent=1 // pred_fallthru
      _
    // Predicated region
    $region14: #{mnist_forward.5} parent=1 // pred_check
      _
    $region15: #{mnist_forward.5} parent=1 // pred_check_branch
      %18 = sbr.rel (0) target = $region17
    $region16: #{mnist_forward.5} parent=1 // pred_region
      _
    $region17: #{mnist_forward.5} parent=1 // pred_fallthru
      _
    // Predicated region
    $region18: #{mnist_forward.5} parent=1 // pred_check
      _
    $region19: #{mnist_forward.5} parent=1 // pred_check_branch
      %20 = sbr.rel (0) target = $region21
    $region20: #{mnist_forward.5} parent=1 // pred_region
      _
    $region21: #{mnist_forward.5} parent=1 // pred_fallthru
      _
    %v22 = vld [vmem:[%s0] sm:$0xf]
    %v23 = vld [vmem:[%s1] sm:$0xf]
    %v24 = vld [vmem:[%s1 + $0x4] sm:$0xf]
    %v25 = vld [vmem:[%s1 + $0x8] sm:$0xf]
    %v26 = vld [vmem:[%s1 + $0xc] sm:$0xf]
    %v27 = vld [vmem:[%s1 + $0x10] sm:$0xf]
    %v28 = vld [vmem:[%s1 + $0x14] sm:$0xf]
    %v29 = vld [vmem:[%s1 + $0x18] sm:$0xf]
    %v30 = vld [vmem:[%s1 + $0x1c] sm:$0xf]
    %v31 = vld [vmem:[%s1 + $0x20] sm:$0xf]
    %v32 = vld [vmem:[%s1 + $0x24] sm:$0xf]
    %v33 = vld [vmem:[%s1 + $0x28] sm:$0xf]
    %v34 = vld [vmem:[%s1 + $0x2c] sm:$0xf]
    %v35 = vld [vmem:[%s1 + $0x30] sm:$0xf]
    %v36 = vld [vmem:[%s1 + $0x34] sm:$0xf]
    %v37 = vld [vmem:[%s1 + $0x38] sm:$0xf]
    %v38 = vld [vmem:[%s1 + $0x3c] sm:$0xf]
    %v39 = vld [vmem:[%s1 + $0x40] sm:$0xf]
    %v40 = vld [vmem:[%s1 + $0x44] sm:$0xf]
    %v41 = vld [vmem:[%s1 + $0x48] sm:$0xf]
    %v42 = vld [vmem:[%s1 + $0x4c] sm:$0xf]
    %v43 = vld [vmem:[%s1 + $0x50] sm:$0xf]
    %v44 = vld [vmem:[%s1 + $0x54] sm:$0xf]
    %v45 = vld [vmem:[%s1 + $0x58] sm:$0xf]
    %v46 = vld [vmem:[%s1 + $0x5c] sm:$0xf]
    %v47 = vld [vmem:[%s1 + $0x60] sm:$0xf]
    %v48 = vld [vmem:[%s1 + $0x64] sm:$0xf]
    %v49 = vld [vmem:[%s1 + $0x68] sm:$0xf]
    %v50 = vld [vmem:[%s1 + $0x6c] sm:$0xf]
    %v51 = vld [vmem:[%s1 + $0x70] sm:$0xf]
    %v52 = vld [vmem:[%s1 + $0x74] sm:$0xf]
    %v53 = vld [vmem:[%s1 + $0x78] sm:$0xf]
    %v54 = vld [vmem:[%s1 + $0x7c] sm:$0xf]
    %v55 = vld [vmem:[%s1 + $0x80] sm:$0xf]
    %v56 = vld [vmem:[%s1 + $0x84] sm:$0xf]
    %v57 = vld [vmem:[%s1 + $0x88] sm:$0xf]
    %v58 = vld [vmem:[%s1 + $0x8c] sm:$0xf]
    %v59 = vld [vmem:[%s1 + $0x90] sm:$0xf]
    %v60 = vld [vmem:[%s1 + $0x94] sm:$0xf]
    %v61 = vld [vmem:[%s1 + $0x98] sm:$0xf]
    %v62 = vld [vmem:[%s1 + $0x9c] sm:$0xf]
    %v63 = vld [vmem:[%s1 + $0xa0] sm:$0xf]
    %v64 = vld [vmem:[%s1 + $0xa4] sm:$0xf]
    %v65 = vld [vmem:[%s1 + $0xa8] sm:$0xf]
    %v66 = vld [vmem:[%s1 + $0xac] sm:$0xf]
    %v67 = vld [vmem:[%s1 + $0xb0] sm:$0xf]
    %v68 = vld [vmem:[%s1 + $0xb4] sm:$0xf]
    %v69 = vld [vmem:[%s1 + $0xb8] sm:$0xf]
    %v70 = vld [vmem:[%s1 + $0xbc] sm:$0xf]
    %v71 = vld [vmem:[%s1 + $0xc0] sm:$0xf]
    %v72 = vld [vmem:[%s1 + $0xc4] sm:$0xf]
    %v73 = vld [vmem:[%s1 + $0xc8] sm:$0xf]
    %v74 = vld [vmem:[%s1 + $0xcc] sm:$0xf]
    %v75 = vld [vmem:[%s1 + $0xd0] sm:$0xf]
    %v76 = vld [vmem:[%s1 + $0xd4] sm:$0xf]
    %v77 = vld [vmem:[%s1 + $0xd8] sm:$0xf]
    %v78 = vld [vmem:[%s1 + $0xdc] sm:$0xf]
    %v79 = vld [vmem:[%s1 + $0xe0] sm:$0xf]
    %v80 = vld [vmem:[%s1 + $0xe4] sm:$0xf]
    %v81 = vld [vmem:[%s1 + $0xe8] sm:$0xf]
    %v82 = vld [vmem:[%s1 + $0xec] sm:$0xf]
    %v83 = vld [vmem:[%s1 + $0xf0] sm:$0xf]
    %v84 = vld [vmem:[%s1 + $0xf4] sm:$0xf]
    %v85 = vld [vmem:[%s1 + $0xf8] sm:$0xf]
    %v86 = vld [vmem:[%s1 + $0xfc] sm:$0xf]
    %v87 = vld [vmem:[%s2] sm:$0x1]
    %v89 = vlaneseq
    %v90 = vshrl.u32 %v89, 7
    %v91 = vsub.s32 0, %v90
    %v92 = vrot.slane %v87, %v91
    %v96 = vunpack.c.l.s4 1966171168
    %v97 = vunpack.c.0.s8 %v96
    %v98 = vlaneseq
    %v99 = vshrl.u32 %v98, 7
    %v100 = vsub.s32 %v97, %v99
    %v101 = vrot.slane %v22, %v100
    %v102 = vcombine.high %v101, %v101
    %v104 = vunpack.c.l.s4 1966171168
    %v105 = vunpack.c.0.s8 %v104
    %v106 = vlaneseq
    %v107 = vshrl.u32 %v106, 7
    %v108 = vsub.s32 %v105, %v107
    %v109 = vrot.slane %v101, %v108
    %v111 = vunpack.c.l.s4 1966171168
    %v112 = vunpack.c.0.s8 %v111
    %v113 = vlaneseq
    %v114 = vshrl.u32 %v113, 7
    %v115 = vsub.s32 %v112, %v114
    %v116 = vrot.slane %v102, %v115
    %v117 = vcombine.high %v109, %v109
    %v118 = vcombine.high %v116, %v116
    %v187 = vunpack.c.l.b16 %v23
    %v188 = vunpack.c.l.b16 %v24
    %v189 = vunpack.c.l.b16 %v25
    %v190 = vunpack.c.l.b16 %v26
    %v191 = vunpack.c.l.b16 %v27
    %v192 = vunpack.c.l.b16 %v28
    %v193 = vunpack.c.l.b16 %v29
    %v194 = vunpack.c.l.b16 %v30
    %v195 = vunpack.c.l.b16 %v31
    %v196 = vunpack.c.l.b16 %v32
    %v197 = vunpack.c.l.b16 %v33
    %v198 = vunpack.c.l.b16 %v34
    %v199 = vunpack.c.l.b16 %v35
    %v200 = vunpack.c.l.b16 %v36
    %v201 = vunpack.c.l.b16 %v37
    %v202 = vunpack.c.l.b16 %v38
    %v203 = vunpack.c.l.b16 %v39
    %v204 = vunpack.c.l.b16 %v40
    %v205 = vunpack.c.l.b16 %v41
    %v206 = vunpack.c.l.b16 %v42
    %v207 = vunpack.c.l.b16 %v43
    %v208 = vunpack.c.l.b16 %v44
    %v209 = vunpack.c.l.b16 %v45
    %v210 = vunpack.c.l.b16 %v46
    %v211 = vunpack.c.l.b16 %v47
    %v212 = vunpack.c.l.b16 %v48
    %v213 = vunpack.c.l.b16 %v49
    %v214 = vunpack.c.l.b16 %v50
    %v215 = vunpack.c.l.b16 %v51
    %v216 = vunpack.c.l.b16 %v52
    %v217 = vunpack.c.l.b16 %v53
    %v218 = vunpack.c.l.b16 %v54
    %v219 = vunpack.c.l.b16 %v55
    %v220 = vunpack.c.l.b16 %v56
    %v221 = vunpack.c.l.b16 %v57
    %v222 = vunpack.c.l.b16 %v58
    %v223 = vunpack.c.l.b16 %v59
    %v224 = vunpack.c.l.b16 %v60
    %v225 = vunpack.c.l.b16 %v61
    %v226 = vunpack.c.l.b16 %v62
    %v227 = vunpack.c.l.b16 %v63
    %v228 = vunpack.c.l.b16 %v64
    %v229 = vunpack.c.l.b16 %v65
    %v230 = vunpack.c.l.b16 %v66
    %v231 = vunpack.c.l.b16 %v67
    %v232 = vunpack.c.l.b16 %v68
    %v233 = vunpack.c.l.b16 %v69
    %v234 = vunpack.c.l.b16 %v70
    %v235 = vunpack.c.l.b16 %v71
    %v236 = vunpack.c.l.b16 %v72
    %v237 = vunpack.c.l.b16 %v73
    %v238 = vunpack.c.l.b16 %v74
    %v239 = vunpack.c.l.b16 %v75
    %v240 = vunpack.c.l.b16 %v76
    %v241 = vunpack.c.l.b16 %v77
    %v242 = vunpack.c.l.b16 %v78
    %v243 = vunpack.c.l.b16 %v79
    %v244 = vunpack.c.l.b16 %v80
    %v245 = vunpack.c.l.b16 %v81
    %v246 = vunpack.c.l.b16 %v82
    %v247 = vunpack.c.l.b16 %v83
    %v248 = vunpack.c.l.b16 %v84
    %v249 = vunpack.c.l.b16 %v85
    %v250 = vunpack.c.l.b16 %v86
    %v251 = vpack.c.b16 %v188, %v187
    %v252 = vpack.c.b16 %v190, %v189
    %v253 = vpack.c.b16 %v192, %v191
    %v254 = vpack.c.b16 %v194, %v193
    %v255 = vpack.c.b16 %v196, %v195
    %v256 = vpack.c.b16 %v198, %v197
    %v257 = vpack.c.b16 %v200, %v199
    %v258 = vpack.c.b16 %v202, %v201
    %v259 = vpack.c.b16 %v204, %v203
    %v260 = vpack.c.b16 %v206, %v205
    %v261 = vpack.c.b16 %v208, %v207
    %v262 = vpack.c.b16 %v210, %v209
    %v263 = vpack.c.b16 %v212, %v211
    %v264 = vpack.c.b16 %v214, %v213
    %v265 = vpack.c.b16 %v216, %v215
    %v266 = vpack.c.b16 %v218, %v217
    %v267 = vpack.c.b16 %v220, %v219
    %v268 = vpack.c.b16 %v222, %v221
    %v269 = vpack.c.b16 %v224, %v223
    %v270 = vpack.c.b16 %v226, %v225
    %v271 = vpack.c.b16 %v228, %v227
    %v272 = vpack.c.b16 %v230, %v229
    %v273 = vpack.c.b16 %v232, %v231
    %v274 = vpack.c.b16 %v234, %v233
    %v275 = vpack.c.b16 %v236, %v235
    %v276 = vpack.c.b16 %v238, %v237
    %v277 = vpack.c.b16 %v240, %v239
    %v278 = vpack.c.b16 %v242, %v241
    %v279 = vpack.c.b16 %v244, %v243
    %v280 = vpack.c.b16 %v246, %v245
    %v281 = vpack.c.b16 %v248, %v247
    %v282 = vpack.c.b16 %v250, %v249
    %315 = vmatprep.subr.bf16.mxu0 0
    %316 = vmatpush1.bf16.msra.mxu0 %v251
    %317 = vmatprep.subr.bf16.mxu0 0
    %318 = vmatpush1.bf16.msra.mxu0 %v252
    %319 = vmatprep.subr.bf16.mxu0 0
    %320 = vmatpush1.bf16.msra.mxu0 %v253
    %321 = vmatprep.subr.bf16.mxu0 0
    %322 = vmatpush1.bf16.msra.mxu0 %v254
    %323 = vmatprep.subr.bf16.mxu0 0
    %324 = vmatpush1.bf16.msra.mxu0 %v255
    %325 = vmatprep.subr.bf16.mxu0 0
    %326 = vmatpush1.bf16.msra.mxu0 %v256
    %327 = vmatprep.subr.bf16.mxu0 0
    %328 = vmatpush1.bf16.msra.mxu0 %v257
    %329 = vmatprep.subr.bf16.mxu0 0
    %330 = vmatpush1.bf16.msra.mxu0 %v258
    %331 = vmatprep.subr.bf16.mxu0 0
    %332 = vmatpush1.bf16.msra.mxu0 %v259
    %333 = vmatprep.subr.bf16.mxu0 0
    %334 = vmatpush1.bf16.msra.mxu0 %v260
    %335 = vmatprep.subr.bf16.mxu0 0
    %336 = vmatpush1.bf16.msra.mxu0 %v261
    %337 = vmatprep.subr.bf16.mxu0 0
    %338 = vmatpush1.bf16.msra.mxu0 %v262
    %339 = vmatprep.subr.bf16.mxu0 0
    %340 = vmatpush1.bf16.msra.mxu0 %v263
    %341 = vmatprep.subr.bf16.mxu0 0
    %342 = vmatpush1.bf16.msra.mxu0 %v264
    %343 = vmatprep.subr.bf16.mxu0 0
    %344 = vmatpush1.bf16.msra.mxu0 %v265
    %345 = vmatprep.subr.bf16.mxu0 0
    %346 = vmatpush1.bf16.msra.mxu0 %v266
    %347 = vmatprep.mubr.bf16.mxu0 %v116
    %348 = vmatmul.mubr.bf16.gmra.mrb[0].mxu0 %v109
    %v349 = vpop.f32.mrb[0].mxu0
    %v350 = vadd.f32 %v92, %v349
    %v351 = vpop.f32.mrb[0].mxu0
    %v352 = vpop.f32.mrb[0].mxu0
    %v353 = vpop.f32.mrb[0].mxu0
    %354 = vdwg.mxu0
    %355 = vmatprep.subr.bf16.mxu0 0
    %356 = vmatpush1.bf16.msra.mxu0 %v267
    %357 = vmatprep.subr.bf16.mxu0 0
    %358 = vmatpush1.bf16.msra.mxu0 %v268
    %359 = vmatprep.subr.bf16.mxu0 0
    %360 = vmatpush1.bf16.msra.mxu0 %v269
    %361 = vmatprep.subr.bf16.mxu0 0
    %362 = vmatpush1.bf16.msra.mxu0 %v270
    %363 = vmatprep.subr.bf16.mxu0 0
    %364 = vmatpush1.bf16.msra.mxu0 %v271
    %365 = vmatprep.subr.bf16.mxu0 0
    %366 = vmatpush1.bf16.msra.mxu0 %v272
    %367 = vmatprep.subr.bf16.mxu0 0
    %368 = vmatpush1.bf16.msra.mxu0 %v273
    %369 = vmatprep.subr.bf16.mxu0 0
    %370 = vmatpush1.bf16.msra.mxu0 %v274
    %371 = vmatprep.subr.bf16.mxu0 0
    %372 = vmatpush1.bf16.msra.mxu0 %v275
    %373 = vmatprep.subr.bf16.mxu0 0
    %374 = vmatpush1.bf16.msra.mxu0 %v276
    %375 = vmatprep.subr.bf16.mxu0 0
    %376 = vmatpush1.bf16.msra.mxu0 %v277
    %377 = vmatprep.subr.bf16.mxu0 0
    %378 = vmatpush1.bf16.msra.mxu0 %v278
    %379 = vmatprep.subr.bf16.mxu0 0
    %380 = vmatpush1.bf16.msra.mxu0 %v279
    %381 = vmatprep.subr.bf16.mxu0 0
    %382 = vmatpush1.bf16.msra.mxu0 %v280
    %383 = vmatprep.subr.bf16.mxu0 0
    %384 = vmatpush1.bf16.msra.mxu0 %v281
    %385 = vmatprep.subr.bf16.mxu0 0
    %386 = vmatpush1.bf16.msra.mxu0 %v282
    %387 = vmatprep.mubr.bf16.mxu0 %v118
    %388 = vmatmul.mubr.bf16.gmra.mrb[0].mxu0 %v117
    %v389 = vpop.f32.mrb[0].mxu0
    %v390 = vadd.f32 %v350, %v389
    %v391 = vpop.f32.mrb[0].mxu0
    %v392 = vpop.f32.mrb[0].mxu0
    %v393 = vpop.f32.mrb[0].mxu0
    %394 = vdwg.mxu0
    %v395 = vmax.f32 %v390, 0.0
    %v396 = vpack.c.bf16 %v395, %v395
    %v397 = vld [vmem:[%s3] sm:$0xf]
    %v398 = vld [vmem:[%s3 + $0x4] sm:$0xf]
    %v399 = vld [vmem:[%s3 + $0x8] sm:$0xf]
    %v400 = vld [vmem:[%s3 + $0xc] sm:$0xf]
    %v401 = vld [vmem:[%s3 + $0x10] sm:$0xf]
    %v402 = vld [vmem:[%s3 + $0x14] sm:$0xf]
    %v403 = vld [vmem:[%s3 + $0x18] sm:$0xf]
    %v404 = vld [vmem:[%s3 + $0x1c] sm:$0xf]
    %v405 = vld [vmem:[%s3 + $0x20] sm:$0xf]
    %v406 = vld [vmem:[%s3 + $0x24] sm:$0xf]
    %v407 = vld [vmem:[%s3 + $0x28] sm:$0xf]
    %v408 = vld [vmem:[%s3 + $0x2c] sm:$0xf]
    %v409 = vld [vmem:[%s3 + $0x30] sm:$0xf]
    %v410 = vld [vmem:[%s3 + $0x34] sm:$0xf]
    %v411 = vld [vmem:[%s3 + $0x38] sm:$0xf]
    %v412 = vld [vmem:[%s3 + $0x3c] sm:$0xf]
    %v413 = vld [vmem:[%s4] sm:$0x1]
    %v415 = vlaneseq
    %v416 = vshrl.u32 %v415, 7
    %v417 = vsub.s32 0, %v416
    %v418 = vrot.slane %v413, %v417
    %v436 = vunpack.c.l.b16 %v397
    %v437 = vunpack.c.l.b16 %v398
    %v438 = vunpack.c.l.b16 %v399
    %v439 = vunpack.c.l.b16 %v400
    %v440 = vunpack.c.l.b16 %v401
    %v441 = vunpack.c.l.b16 %v402
    %v442 = vunpack.c.l.b16 %v403
    %v443 = vunpack.c.l.b16 %v404
    %v444 = vunpack.c.l.b16 %v405
    %v445 = vunpack.c.l.b16 %v406
    %v446 = vunpack.c.l.b16 %v407
    %v447 = vunpack.c.l.b16 %v408
    %v448 = vunpack.c.l.b16 %v409
    %v449 = vunpack.c.l.b16 %v410
    %v450 = vunpack.c.l.b16 %v411
    %v451 = vunpack.c.l.b16 %v412
    %v452 = vpack.c.b16 %v437, %v436
    %v453 = vpack.c.b16 %v439, %v438
    %v454 = vpack.c.b16 %v441, %v440
    %v455 = vpack.c.b16 %v443, %v442
    %v456 = vpack.c.b16 %v445, %v444
    %v457 = vpack.c.b16 %v447, %v446
    %v458 = vpack.c.b16 %v449, %v448
    %v459 = vpack.c.b16 %v451, %v450
    %468 = vmatprep.subr.bf16.mxu0 0
    %469 = vmatpush1.bf16.msra.mxu0 %v452
    %470 = vmatprep.subr.bf16.mxu0 0
    %471 = vmatpush1.bf16.msra.mxu0 %v453
    %472 = vmatprep.subr.bf16.mxu0 0
    %473 = vmatpush1.bf16.msra.mxu0 %v454
    %474 = vmatprep.subr.bf16.mxu0 0
    %475 = vmatpush1.bf16.msra.mxu0 %v455
    %476 = vmatprep.subr.bf16.mxu0 0
    %477 = vmatpush1.bf16.msra.mxu0 %v456
    %478 = vmatprep.subr.bf16.mxu0 0
    %479 = vmatpush1.bf16.msra.mxu0 %v457
    %480 = vmatprep.subr.bf16.mxu0 0
    %481 = vmatpush1.bf16.msra.mxu0 %v458
    %482 = vmatprep.subr.bf16.mxu0 0
    %483 = vmatpush1.bf16.msra.mxu0 %v459
    %484 = vmatprep.subr.bf16.mxu0 0
    %485 = vmatpush1.bf16.msra.mxu0 0
    %486 = vmatprep.subr.bf16.mxu0 0
    %487 = vmatpush1.bf16.msra.mxu0 0
    %488 = vmatprep.subr.bf16.mxu0 0
    %489 = vmatpush1.bf16.msra.mxu0 0
    %490 = vmatprep.subr.bf16.mxu0 0
    %491 = vmatpush1.bf16.msra.mxu0 0
    %492 = vmatprep.subr.bf16.mxu0 0
    %493 = vmatpush1.bf16.msra.mxu0 0
    %494 = vmatprep.subr.bf16.mxu0 0
    %495 = vmatpush1.bf16.msra.mxu0 0
    %496 = vmatprep.subr.bf16.mxu0 0
    %497 = vmatpush1.bf16.msra.mxu0 0
    %498 = vmatprep.subr.bf16.mxu0 0
    %499 = vmatpush1.bf16.msra.mxu0 0
    %500 = vmatprep.mubr.bf16.mxu0 0
    %501 = vmatmul.mubr.bf16.gmra.mrb[0].mxu0 %v396
    %v502 = vpop.f32.mrb[0].mxu0
    %v503 = vadd.f32 %v418, %v502
    %v504 = vpop.f32.mrb[0].mxu0
    %v505 = vpop.f32.mrb[0].mxu0
    %v506 = vpop.f32.mrb[0].mxu0
    %507 = vdwg.mxu0
    %v508 = vlaneseq
    %v509 = vand.u32 %v508, 127
    %vm510 = vcmp.lt.s32.totalorder %v509, 10
    %v511 = vsel %vm510, %v503, -1e+30
    %vm512 = vcmask 1041408
    %v513 = vsel %vm512, %v511, -inf
    %514 = vmax.xlane.f32.xlu0 %v513
    %v515 = vpop.xlane.xlu0 %514
    %v516 = vsub.f32 %v511, %v515
    %v517 = vmul.f32 %v516, 1.442695
    %v518 = vpow.pop %v517
    %v519 = vsel %vm512, %v518, 0.0
    %520 = vadd.xlane.f32.xlu0 %v519
    %v521 = vpop.xlane.xlu0 %520
    %v522 = vlog2.pop %v521
    %v523 = vmul.f32 %v522, 0.6931472
    %v524 = vsub.f32 %v516, %v523
    %525 = vst [vmem:[#allocation2] sm:$0x3] %v524
    // Predicated region
    $region22: #{mnist_forward.5} parent=1 // pred_check
      _
    $region23: #{mnist_forward.5} parent=1 // pred_check_branch
      %527 = sbr.rel (0) target = $region25
    $region24: #{mnist_forward.5} parent=1 // pred_region
      %s529 = ssub.s32 32, 32
      %530 = vsyncadd [#allocation3], %s529
      %s532 = sshll.u32 [#allocation2], 4
      %s533 = int_to_ptr.vmem [resolvable:$true] %s532
      %535 = dma.vmem_to_hbm [thread:$0]  %s533, 32, %s5, [#allocation3]
    $region25: #{mnist_forward.5} parent=1 // pred_fallthru
      _
    // Predicated region
    $region26: #{mnist_forward.5} parent=1 // pred_check
      _
    $region27: #{mnist_forward.5} parent=1 // pred_check_branch
      %537 = sbr.rel (0) target = $region29
    $region28: #{mnist_forward.5} parent=1 // pred_region
      %538 = dma.done [#allocation3], 32
    $region29: #{mnist_forward.5} parent=1 // pred_fallthru
      _
    %539 = vsyncpa [#allocation3], 1

</llo_original>
